<compile_context>
chip_gen: v7x
topology: tpu7x:2x2x1
jax: 0.10.0
libtpu: 0.0.40
codegen_flags: <defaults>
</compile_context>

<pallas_src>
import functools
import math

import jax
import jax.numpy as jnp
from jax import lax
from jax.experimental import pallas as pl
from jax.experimental.pallas import tpu as pltpu

BN_EPS = 1e-3


@functools.lru_cache(maxsize=None)
def _vmem_limit_bytes():
    try:
        kind = jax.devices()[0].device_kind.lower()
    except Exception:
        kind = ""
    if "v5" in kind or "v6" in kind:
        return 64 * 1024 * 1024          # 128 MiB physical VMEM on v5e/v6e
    return 32 * 1024 * 1024              # safe margin on v7x's 64 MiB


def _cp(sem):
    return pltpu.CompilerParams(vmem_limit_bytes=_vmem_limit_bytes(),
                                dimension_semantics=sem)


def _apply_act(x, act):
    if act == "silu":
        return x * jax.nn.sigmoid(x)
    if act == "sigmoid":
        return jax.nn.sigmoid(x)
    return x


def _pick_tile(m, cands):
    for t in cands:
        if m % t == 0:
            return t
    return m  # full extent (always a legal block)


# ----------------------------- Pallas kernels -----------------------------

def _matmul_kernel(a_ref, b_ref, bias_ref, o_ref, *, act):
    acc = jnp.dot(a_ref[...], b_ref[...], preferred_element_type=jnp.float32)
    acc = acc + bias_ref[...]
    o_ref[...] = _apply_act(acc, act).astype(o_ref.dtype)


def matmul_bias_act(a, b, bias, act="none", out_dtype=jnp.bfloat16):
    """(M,K)bf16 @ (K,N)bf16 + bias(1,N)f32, fused activation, f32 accumulate.

    M/N tiles are capped at 512 and the grid is forced to >=2 steps whenever the
    problem allows it, so there is always DMA/compute overlap and the v7x megacore
    has something to shard.  K is never tiled (largest resident bf16 block ~3 MiB).
    """
    M, K = a.shape
    _, N = b.shape
    tm = _pick_tile(M, (512, 256, 128))
    tn = _pick_tile(N, (512, 256, 128))
    while (M // tm) * (N // tn) < 2 and tn > 128 and N % (tn // 2) == 0:
        tn //= 2
    while (M // tm) * (N // tn) < 2 and tm > 128 and M % (tm // 2) == 0:
        tm //= 2
    return pl.pallas_call(
        functools.partial(_matmul_kernel, act=act),
        out_shape=jax.ShapeDtypeStruct((M, N), out_dtype),
        grid=(M // tm, N // tn),
        in_specs=[
            pl.BlockSpec((tm, K), lambda i, j: (i, 0)),
            pl.BlockSpec((K, tn), lambda i, j: (0, j)),
            pl.BlockSpec((1, tn), lambda i, j: (0, j)),
        ],
        out_specs=pl.BlockSpec((tm, tn), lambda i, j: (i, j)),
        compiler_params=_cp(("parallel", "parallel")),
    )(a, b, bias)


def _pick_ct(C, hz, wz):
    """Channel tile for the depthwise kernel (C is always a multiple of 128)."""
    if hz * wz <= 16:
        cands = (C,)                 # tiny spatial: minimize grid-step overhead
    elif hz * wz <= 64:
        cands = (512, 256, 128)
    else:
        cands = (128,)               # large spatial: deep grid + small accumulator
    for ct in cands:
        if C % ct == 0:
            return ct
    return C


def _pick_strip(hz, wz, ct):
    """Row-strip height so the f32 strip accumulator stays ~<=64 KiB (registers)."""
    limit = max(1, 16384 // (wz * ct))
    strip = 1
    while strip * 2 <= min(hz, limit):
        strip *= 2
    while hz % strip:
        strip //= 2
    return max(strip, 1)


def _dw_kernel(xp_ref, w_ref, b_ref, y_ref, pool_ref, *, k, s, hz, wz, denom, strip):
    """Depthwise kxk conv (stride 1 over the padded tile) + bias + SiLU for one
    (batch, channel-tile) block, with the SE global-average pool of the activated
    output fused as a second output.  For stride>1 blocks the pool is computed
    over the subsampled positions via an iota mask."""
    w = w_ref[...]                                       # (k*k, Ct) bf16
    bias = b_ref[...]                                    # (1, Ct)  f32
    ct = w.shape[-1]
    # Hoisted column shifts: k shifted copies built once, reused for every di row.
    cols = [xp_ref[0, :, dj:dj + wz, :] for dj in range(k)]     # (Hp, wz, Ct) bf16
    if s > 1:
        cmask = (lax.broadcasted_iota(jnp.int32, (1, wz, 1), 1) % s) == 0
    pool_acc = jnp.zeros((1, ct), jnp.float32)
    for r0 in range(0, hz, strip):
        rh = min(strip, hz - r0)
        acc = jnp.zeros((rh, wz, ct), jnp.float32)
        for di in range(k):                              # static unroll over taps
            base = r0 + di
            for dj in range(k):
                t = di * k + dj
                # bf16 multiply (VPU), f32 accumulate.
                acc = acc + cols[dj][base:base + rh] * w[t:t + 1, :]
        acc = acc + bias
        y = acc * jax.nn.sigmoid(acc)                    # SiLU in f32
        y_ref[0, r0:r0 + rh] = y.astype(y_ref.dtype)
        if s > 1:
            rmask = ((r0 + lax.broadcasted_iota(jnp.int32, (rh, 1, 1), 0)) % s) == 0
            y = y * jnp.logical_and(rmask, cmask).astype(jnp.float32)
        pool_acc = pool_acc + jnp.sum(jnp.sum(y, axis=1), axis=0, keepdims=True)
    pool_ref[0] = (pool_acc * (1.0 / denom)).astype(pool_ref.dtype)


def depthwise_conv_pool(x, w, b, k, s, p):
    """Halo-based depthwise conv over a (batch, channel-tile) grid.

    Returns (stride-1 output, SE pool).  The pool already accounts for the stride
    (masked mean over the subsampled positions)."""
    N, H, W, C = x.shape
    xp = jnp.pad(x, ((0, 0), (p, p), (p, p), (0, 0)))
    Hp, Wp = H + 2 * p, W + 2 * p
    hz, wz = Hp - k + 1, Wp - k + 1
    ho, wo = (hz + s - 1) // s, (wz + s - 1) // s
    ct = _pick_ct(C, hz, wz)
    strip = _pick_strip(hz, wz, ct)
    y, pool = pl.pallas_call(
        functools.partial(_dw_kernel, k=k, s=s, hz=hz, wz=wz,
                          denom=float(ho * wo), strip=strip),
        out_shape=(jax.ShapeDtypeStruct((N, hz, wz, C), jnp.bfloat16),
                   jax.ShapeDtypeStruct((N, 1, C), jnp.float32)),
        grid=(N, C // ct),
        in_specs=[pl.BlockSpec((1, Hp, Wp, ct), lambda n, c: (n, 0, 0, c)),
                  pl.BlockSpec((k * k, ct), lambda n, c: (0, c)),
                  pl.BlockSpec((1, ct), lambda n, c: (0, c))],
        out_specs=(pl.BlockSpec((1, hz, wz, ct), lambda n, c: (n, 0, 0, c)),
                   pl.BlockSpec((1, 1, ct), lambda n, c: (n, 0, c))),
        compiler_params=_cp(("parallel", "parallel")),
    )(xp, w, b)
    return y, pool


def _se_proj_kernel(x_ref, p_ref, w1_ref, b1_ref, w2_ref, b2_ref, wp_ref, bp_ref,
                    *rest):
    """Fused MBConv tail: SE gate (FC1->SiLU->FC2->sigmoid from the pooled vector),
    bf16 gate multiply, 1x1 project matmul (BN folded) and optional residual add."""
    if len(rest) == 2:
        r_ref, o_ref = rest
    else:
        (o_ref,) = rest
        r_ref = None
    pooled = p_ref[0].astype(jnp.bfloat16)                               # (1, Cexp)
    s1 = jnp.dot(pooled, w1_ref[...], preferred_element_type=jnp.float32) + b1_ref[...]
    s1 = s1 * jax.nn.sigmoid(s1)
    s2 = jnp.dot(s1.astype(jnp.bfloat16), w2_ref[...],
                 preferred_element_type=jnp.float32) + b2_ref[...]
    gate = jax.nn.sigmoid(s2).astype(jnp.bfloat16)                       # (1, Cexp)
    xs = x_ref[0] * gate                                                 # bf16 scale
    acc = jnp.dot(xs, wp_ref[...], preferred_element_type=jnp.float32) + bp_ref[...]
    if r_ref is not None:
        acc = acc + r_ref[0].astype(jnp.float32)
    o_ref[0] = acc.astype(o_ref.dtype)


def se_scale_project(x, pool, w1, b1, w2, b2, wp, bp, res=None):
    """x:(N,HW,Cexp), pool:(N,1,Cexp) -> (N,HW,Cout); grid (batch, HW tiles)."""
    N, HW, Cexp = x.shape
    Cout = wp.shape[1]
    sq = w1.shape[1]
    thw = min(HW, 256)
    in_specs = [pl.BlockSpec((1, thw, Cexp), lambda n, h: (n, h, 0)),
                pl.BlockSpec((1, 1, Cexp), lambda n, h: (n, 0, 0)),
                pl.BlockSpec((Cexp, sq), lambda n, h: (0, 0)),
                pl.BlockSpec((1, sq), lambda n, h: (0, 0)),
                pl.BlockSpec((sq, Cexp), lambda n, h: (0, 0)),
                pl.BlockSpec((1, Cexp), lambda n, h: (0, 0)),
                pl.BlockSpec((Cexp, Cout), lambda n, h: (0, 0)),
                pl.BlockSpec((1, Cout), lambda n, h: (0, 0))]
    args = [x, pool, w1, b1, w2, b2, wp, bp]
    if res is not None:
        in_specs.append(pl.BlockSpec((1, thw, Cout), lambda n, h: (n, h, 0)))
        args.append(res)
    return pl.pallas_call(
        _se_proj_kernel,
        out_shape=jax.ShapeDtypeStruct((N, HW, Cout), jnp.bfloat16),
        grid=(N, HW // thw),
        in_specs=in_specs,
        out_specs=pl.BlockSpec((1, thw, Cout), lambda n, h: (n, h, 0)),
        compiler_params=_cp(("parallel", "parallel")),
    )(*args)


def _pool_fc_kernel(x_ref, w_ref, b_ref, o_ref):
    x = x_ref[0].astype(jnp.float32)                          # (HW, C)
    pooled = jnp.mean(x, axis=0, keepdims=True)               # (1, C)
    logits = jnp.dot(pooled.astype(jnp.bfloat16), w_ref[...],
                     preferred_element_type=jnp.float32) + b_ref[...]
    o_ref[0] = logits.astype(o_ref.dtype)


def pool_fc(x, w, b):
    """Final global average pool + (lane-padded) classifier matmul in one kernel."""
    N, HW, C = x.shape
    Np = w.shape[1]
    return pl.pallas_call(
        _pool_fc_kernel,
        out_shape=jax.ShapeDtypeStruct((N, 1, Np), jnp.float32),
        grid=(N,),
        in_specs=[pl.BlockSpec((1, HW, C), lambda n: (n, 0, 0)),
                  pl.BlockSpec((C, Np), lambda n: (0, 0)),
                  pl.BlockSpec((1, Np), lambda n: (0, 0))],
        out_specs=pl.BlockSpec((1, 1, Np), lambda n: (n, 0, 0)),
        compiler_params=_cp(("parallel",)),
    )(x, w, b)


# ------------------------------- JAX glue ---------------------------------

def extract_patches(x, k, s, p):
    """im2col -- only used for the 1-channel stem conv (9x blow-up of a 1-ch image)."""
    N, H, W, C = x.shape
    xp = jnp.pad(x, ((0, 0), (p, p), (p, p), (0, 0)))
    Ho = (H + 2 * p - k) // s + 1
    Wo = (W + 2 * p - k) // s + 1
    taps = [xp[:, di:di + s * Ho:s, dj:dj + s * Wo:s, :]
            for di in range(k) for dj in range(k)]
    return jnp.stack(taps, axis=-2), Ho, Wo      # (N, Ho, Wo, k*k, C)


def conv1x1(x, w, b, act):
    N, H, W, C = x.shape
    out = matmul_bias_act(x.reshape(N * H * W, C), w, b, act=act)
    return out.reshape(N, H, W, -1)


def conv_kxk(x, w, b, k, s, p, act):
    pats, Ho, Wo = extract_patches(x, k, s, p)
    N = x.shape[0]
    a = pats.reshape(N * Ho * Wo, pats.shape[-2] * pats.shape[-1])
    out = matmul_bias_act(a, w, b, act=act)
    return out.reshape(N, Ho, Wo, -1)


@functools.partial(jax.jit, static_argnames=("kernel", "stride", "use_res"))
def mbconv(x, p, *, kernel, stride, use_res):
    inp = x
    if "expand" in p:
        x = conv1x1(x, p["expand"]["w"], p["expand"]["b"], act="silu")
    pad = (kernel - 1) // 2
    y, pool = depthwise_conv_pool(x, p["dw"]["w"], p["dw"]["b"], kernel, stride, pad)
    if stride > 1:
        # TODO(synk): column subsample kept outside the kernel (strided sublane
        # slices are avoided in Mosaic); only 4 of 55 blocks are strided and the
        # SE pool is already computed over the subsampled positions in-kernel.
        Ho = (x.shape[1] + 2 * pad - kernel) // stride + 1
        Wo = (x.shape[2] + 2 * pad - kernel) // stride + 1
        y = y[:, ::stride, ::stride, :][:, :Ho, :Wo, :]
    N, Ho, Wo, Cexp = y.shape
    # TODO(synk): StochasticDepth is identity in eval mode; plain residual add (fused).
    res = inp.reshape(N, Ho * Wo, -1) if use_res else None
    out = se_scale_project(y.reshape(N, Ho * Wo, Cexp), pool,
                           p["se"]["w1"], p["se"]["b1"], p["se"]["w2"], p["se"]["b2"],
                           p["project"]["w"], p["project"]["b"], res)
    return out.reshape(N, Ho, Wo, -1)


@jax.jit
def stem_forward(x_nchw, w, b):
    x = jnp.transpose(x_nchw, (0, 2, 3, 1)).astype(jnp.bfloat16)   # NCHW -> NHWC, bf16
    return conv_kxk(x, w, b, 3, 2, 1, act="silu")


@functools.partial(jax.jit, static_argnames=("num_classes",))
def head_forward(x, w_head, b_head, w_fc, b_fc, *, num_classes):
    x = conv1x1(x, w_head, b_head, act="silu")
    N, H, W, C = x.shape
    # TODO(synk): classifier Dropout(p=0.5) is identity in eval mode.
    logits = pool_fc(x.reshape(N, H * W, C), w_fc, b_fc)           # (N, 1, 128)
    return logits.reshape(N, -1)[:, :num_classes].astype(jnp.float32)


def model_forward(x_nchw, params):
    x = stem_forward(x_nchw, params["stem"]["w"], params["stem"]["b"])
    for (k, s, use_res), p in zip(params["block_cfg"], params["blocks"]):
        x = mbconv(x, p, kernel=k, stride=s, use_res=use_res)
    return head_forward(x, params["head"]["w"], params["head"]["b"],
                        params["fc"]["w"], params["fc"]["b"],
                        num_classes=params["num_classes"])


# ---------------------- EfficientNet-B7 configuration ---------------------

def _make_divisible(v, divisor=8):
    new_v = max(divisor, int(v + divisor / 2) // divisor * divisor)
    if new_v < 0.9 * v:
        new_v += divisor
    return new_v


def efficientnet_b7_config():
    width, depth = 2.0, 3.1
    base = [  # expand_ratio, kernel, stride, in_c, out_c, layers (B0 base)
        (1, 3, 1, 32, 16, 1),
        (6, 3, 2, 16, 24, 2),
        (6, 5, 2, 24, 40, 2),
        (6, 3, 2, 40, 80, 3),
        (6, 5, 1, 80, 112, 3),
        (6, 5, 2, 112, 192, 4),
        (6, 3, 1, 192, 320, 1),
    ]
    return [(er, k, s,
             _make_divisible(ic * width),
             _make_divisible(oc * width),
             int(math.ceil(n * depth)))
            for er, k, s, ic, oc, n in base]


# -------------------------- Parameter construction ------------------------
# Channel-padding scheme (exact-math zero padding): padded channels carry zero
# weights & biases everywhere, so they remain exactly zero through every block
# while all stores stay lane-dense and the MXU contraction dim is 128-aligned.

def _pad_io(c):                       # block input/output channels
    return max(c, 128)


def _pad_exp(c):                      # expanded (depthwise) channels
    return ((c + 127) // 128) * 128


class KeyGen:
    def __init__(self, key):
        self.key = key

    def __call__(self):
        self.key, sub = jax.random.split(self.key)
        return sub


def init_bn(kg, c):
    gamma = 1.0 + 0.1 * jax.random.normal(kg(), (c,), jnp.float32)
    beta = 0.1 * jax.random.normal(kg(), (c,), jnp.float32)
    mean = 0.1 * jax.random.normal(kg(), (c,), jnp.float32)
    var = 1.0 + 0.1 * jnp.abs(jax.random.normal(kg(), (c,), jnp.float32))
    return gamma, beta, mean, var


def fold_bn(w, bn):
    gamma, beta, mean, var = bn
    scale = gamma / jnp.sqrt(var + BN_EPS)
    # weights -> bf16 for MXU; folded bias stays f32 (added to the f32 accumulator)
    return (w * scale).astype(jnp.bfloat16), (beta - mean * scale).reshape(1, -1)


def init_conv1x1_bn(kg, cin_t, cout_t, cin_p, cout_p):
    w = jax.random.normal(kg(), (cin_t, cout_t), jnp.float32) / math.sqrt(cin_t)
    w, b = fold_bn(w, init_bn(kg, cout_t))
    wp = jnp.zeros((cin_p, cout_p), jnp.bfloat16).at[:cin_t, :cout_t].set(w)
    bp = jnp.zeros((1, cout_p), jnp.float32).at[:, :cout_t].set(b)
    return {"w": wp, "b": bp}


def init_dw_bn(kg, k, c_t, c_p):
    w = jax.random.normal(kg(), (k * k, c_t), jnp.float32) / math.sqrt(k * k)
    w, b = fold_bn(w, init_bn(kg, c_t))
    wp = jnp.zeros((k * k, c_p), jnp.bfloat16).at[:, :c_t].set(w)
    bp = jnp.zeros((1, c_p), jnp.float32).at[:, :c_t].set(b)
    return {"w": wp, "b": bp}


def init_conv_kxk_bn(kg, k, cin, cout_t, cout_p):
    w = jax.random.normal(kg(), (k * k * cin, cout_t), jnp.float32) / math.sqrt(k * k * cin)
    w, b = fold_bn(w, init_bn(kg, cout_t))
    wp = jnp.zeros((k * k * cin, cout_p), jnp.bfloat16).at[:, :cout_t].set(w)
    bp = jnp.zeros((1, cout_p), jnp.float32).at[:, :cout_t].set(b)
    return {"w": wp, "b": bp}


def init_se(kg, exp_t, exp_p, sq):
    w1 = (jax.random.normal(kg(), (exp_t, sq), jnp.float32) / math.sqrt(exp_t)).astype(jnp.bfloat16)
    b1 = 0.01 * jax.random.normal(kg(), (1, sq), jnp.float32)
    w2 = (jax.random.normal(kg(), (sq, exp_t), jnp.float32) / math.sqrt(sq)).astype(jnp.bfloat16)
    b2 = 0.01 * jax.random.normal(kg(), (1, exp_t), jnp.float32)
    w1p = jnp.zeros((exp_p, sq), jnp.bfloat16).at[:exp_t, :].set(w1)
    w2p = jnp.zeros((sq, exp_p), jnp.bfloat16).at[:, :exp_t].set(w2)
    b2p = jnp.zeros((1, exp_p), jnp.float32).at[:, :exp_t].set(b2)
    return {"w1": w1p, "b1": b1, "w2": w2p, "b2": b2p}


def init_fc(kg, cin, cout, pad_to=128):
    """Classifier, zero-padded to a lane-dense 128-wide output (sliced back to cout)."""
    w = jax.random.normal(kg(), (cin, cout), jnp.float32) / math.sqrt(cin)
    b = 0.01 * jax.random.normal(kg(), (cout,), jnp.float32)
    wp = jnp.zeros((cin, pad_to), jnp.float32).at[:, :cout].set(w).astype(jnp.bfloat16)
    bp = jnp.zeros((1, pad_to), jnp.float32).at[:, :cout].set(b)
    return {"w": wp, "b": bp}


def build_params(key, num_classes=7):
    kg = KeyGen(key)
    cfg = efficientnet_b7_config()
    params = {"num_classes": num_classes}
    stem_out = cfg[0][3]                                     # 64 (modified stem: 1 -> 64)
    params["stem"] = init_conv_kxk_bn(kg, 3, 1, stem_out, _pad_io(stem_out))

    block_cfg, blocks = [], []
    for er, k, s, ic, oc, n in cfg:
        for i in range(n):
            cin_t = ic if i == 0 else oc
            stride = s if i == 0 else 1
            exp_t = _make_divisible(cin_t * er)
            cin_p, cout_p = _pad_io(cin_t), _pad_io(oc)
            has_expand = exp_t != cin_t
            exp_p = _pad_exp(exp_t) if has_expand else cin_p
            sq = max(1, cin_t // 4)
            p = {}
            if has_expand:
                p["expand"] = init_conv1x1_bn(kg, cin_t, exp_t, cin_p, exp_p)
            p["dw"] = init_dw_bn(kg, k, exp_t, exp_p)
            p["se"] = init_se(kg, exp_t, exp_p, sq)
            p["project"] = init_conv1x1_bn(kg, exp_t, oc, exp_p, cout_p)
            blocks.append(p)
            block_cfg.append((k, stride, bool(stride == 1 and cin_t == oc)))
    params["blocks"] = blocks
    params["block_cfg"] = block_cfg

    head_in = cfg[-1][4]                                     # 640
    head_out = 4 * head_in                                   # 2560
    params["head"] = init_conv1x1_bn(kg, head_in, head_out, head_in, head_out)
    params["fc"] = init_fc(kg, head_out, num_classes, pad_to=128)
    return params


# ---------------------------------- main -----------------------------------

if __name__ == "__main__":
    key = jax.random.PRNGKey(0)
    k_in, k_par = jax.random.split(key)

    # Small input consistent with the module: single-channel image, batch=2.
    x = jax.random.normal(k_in, (2, 1, 64, 64), jnp.float32)

    params = build_params(k_par, num_classes=7)

    out = model_forward(x, params)
    out = jax.block_until_ready(out)
    assert out.shape == (2, 7) and out.dtype == jnp.float32

    print("KERNEL_OK")
</pallas_src>

<mosaic_0001>
module attributes {stable_mosaic.version = 11 : i64} {
  func.func @_matmul_kernel(%arg0: i32, %arg1: i32, %arg2: memref<512x9xbf16, #tpu.memory_space<vmem>>, %arg3: memref<9x128xbf16, #tpu.memory_space<vmem>>, %arg4: memref<1x128xf32, #tpu.memory_space<vmem>>, %arg5: memref<512x128xbf16, #tpu.memory_space<vmem>>) attributes {dimension_semantics = [#tpu.dimension_semantics<parallel>, #tpu.dimension_semantics<parallel>], iteration_bounds = array<i64: 4, 1>, scalar_prefetch = 0 : i64, scratch_operands = 0 : i64, tpu.core_type = #tpu.core_type<tc>, window_params = [{transform_indices = @transform_0, window_bounds = array<i64: 512, 9>}, {transform_indices = @transform_1, window_bounds = array<i64: 9, 128>}, {transform_indices = @transform_2, window_bounds = array<i64: 1, 128>}, {transform_indices = @transform_3, window_bounds = array<i64: 512, 128>}]} {
    %c0 = arith.constant 0 : index
    %c0_0 = arith.constant 0 : index
    %0 = vector.load %arg2[%c0, %c0_0] : memref<512x9xbf16, #tpu.memory_space<vmem>>, vector<512x9xbf16>
    %c0_1 = arith.constant 0 : index
    %c0_2 = arith.constant 0 : index
    %1 = vector.load %arg3[%c0_1, %c0_2] : memref<9x128xbf16, #tpu.memory_space<vmem>>, vector<9x128xbf16>
    %cst = arith.constant dense<0.000000e+00> : vector<512x128xf32>
    %2 = tpu.matmul %0, %1, %cst {dimension_numbers = #tpu.dot_dimension_numbers<[1], [0], [0], [1], [0, 0, 1, 1], [], []>} : vector<512x9xbf16>, vector<9x128xbf16>, vector<512x128xf32> -> vector<512x128xf32>
    %c0_3 = arith.constant 0 : index
    %c0_4 = arith.constant 0 : index
    %3 = vector.load %arg4[%c0_3, %c0_4] : memref<1x128xf32, #tpu.memory_space<vmem>>, vector<1x128xf32>
    %4 = vector.broadcast %3 : vector<1x128xf32> to vector<512x128xf32>
    %5 = arith.addf %2, %4 : vector<512x128xf32>
    %6 = arith.negf %5 : vector<512x128xf32>
    %7 = math.exp %6 : vector<512x128xf32>
    %cst_5 = arith.constant 1.000000e+00 : f32
    %8 = vector.broadcast %cst_5 : f32 to vector<512x128xf32>
    %9 = arith.addf %8, %7 : vector<512x128xf32>
    %10 = arith.divf %8, %9 : vector<512x128xf32>
    %11 = arith.mulf %5, %10 : vector<512x128xf32>
    %12 = arith.truncf %11 : vector<512x128xf32> to vector<512x128xbf16>
    %c0_6 = arith.constant 0 : index
    %c0_7 = arith.constant 0 : index
    %13 = vector.load %arg5[%c0_6, %c0_7] : memref<512x128xbf16, #tpu.memory_space<vmem>>, vector<512x128xbf16>
    tpu.vector_store %arg5[%c0_6, %c0_7], %12 {strides = array<i32>} : memref<512x128xbf16, #tpu.memory_space<vmem>>, vector<512x128xbf16>,
    return
  }
  func.func @transform_0(%arg0: i32, %arg1: i32) -> (i32, i32) {
    %c0_i32 = arith.constant 0 : i32
    %c0_i32_0 = arith.constant 0 : i32
    return %arg0, %c0_i32 : i32, i32
  }
  func.func @transform_1(%arg0: i32, %arg1: i32) -> (i32, i32) {
    %c0_i32 = arith.constant 0 : i32
    %c0_i32_0 = arith.constant 0 : i32
    return %c0_i32, %arg1 : i32, i32
  }
  func.func @transform_2(%arg0: i32, %arg1: i32) -> (i32, i32) {
    %c0_i32 = arith.constant 0 : i32
    %c0_i32_0 = arith.constant 0 : i32
    return %c0_i32, %arg1 : i32, i32
  }
  func.func @transform_3(%arg0: i32, %arg1: i32) -> (i32, i32) {
    %c0_i32 = arith.constant 0 : i32
    return %arg0, %arg1 : i32, i32
  }
}

</mosaic_0001>

<llo_original>
// kernel: stem_forward.1
$region0: #{stem_forward.1}
  #allocation0 [shape = 'u32[]', space=smem, size = 0x4, offset = 0x4, fixed_abs, tag = 'smem constant byte address 0x4 - core index']
  #allocation1 [shape = 'u32[144,128]{1,0:T(1,128)}', space=vmem, size = 0x12000, scoped, tag = 'internal scratch']
  %s0 = inlined_call_operand.vmem [shape: bf16[2048,9], index: 0, kind: input, shape index: {}]
  %s1 = inlined_call_operand.vmem [shape: bf16[9,128], index: 1, kind: input, shape index: {}]
  %s2 = inlined_call_operand.vmem [shape: f32[1,128], index: 2, kind: input, shape index: {}]
  %s3 = inlined_call_operand.hbm [shape: bf16[2048,128], index: 3, kind: output, shape index: {}]
  %s4 = sld [smem:[#allocation0]]
  $region45: #{stem_forward.1} parent=0
    _
  %s6 = ssub.s32 1, %s4
  %s7 = scalar_select 0, %s6, %s4
  $region1: #{stem_forward.1} parent=0
    #allocation2 [shape = 'u8[262144]{0}', space=vmem, size = 0x40000, scoped, tag = 'output window, operand 0']
    #allocation3 [shape = 's32[2]{0}', space=sflag, size = 0x8, scoped, tag = 'scoped memory for stem_forward.1']
    %8 = vsyncpa [#allocation3], 0
    %s9 = scalar_lea.sflag [#allocation3], 1
    %10 = vsyncpa %s9, 0
    loop: start=0, step=1, limit=6
    $region2: #{stem_forward.1} parent=1 // loop_pre_header
      _
    $region3: #{stem_forward.1} parent=1 // loop_header
      %s12 = sphi 0, %s16
      %p13 = scmp.ge.s32.totalorder %s12, 6
      %s19 = sphi 0, %s31
      %s20 = sphi 0, %s27
      %s21 = sphi 0, %s19
      %s22 = sphi 0, %s20
      %s23 = sphi 0, %s21
      %s24 = sphi 0, %s22
      %s34 = sphi 0, %s36
      %s37 = sphi 0, %s34
      %s38 = sphi 0, %s37
      %s54 = sphi 0, %s38
      %s60 = sphi 0, %s62
      %s63 = sphi 0, %s60
      %s64 = sphi 0, %s63
      %s80 = sphi 0, %s64
      %s86 = sphi 0, %s88
      %s89 = sphi 0, %s86
      %s90 = sphi 0, %s89
      %s106 = sphi 0, %s90
      %s114 = sphi 0, %s116
      %s117 = sphi 0, %s114
      %s118 = sphi 0, %s117
      %s134 = sphi 0, %s118
    $region4: #{stem_forward.1} parent=1 // loop_header_branch
      %15 = sbr.rel (%p13) target = $region8
    $region5: #{stem_forward.1} parent=1 // loop_body
      %s17 = ssub.s32 %s12, 1
      %s18 = ssub.s32 %s12, 2
      %s25 = sadd.s32 1, %s20
      %p26 = scmp.ge.s32.totalorder %s25, 1
      %s27 = scalar_select %p26, 0, %s25
      %s28 = sadd.s32 1, %s19
      %s29 = scalar_select %p26, %s28, %s19
      %p30 = scmp.ge.s32.totalorder %s29, 4
      %s31 = scalar_select %p30, 0, %s29
      %s32 = ssub.s32 %s19, %s31
      %p33 = scmp.eq.s32.totalorder %s32, 0
      %s35 = sadd.s32 %s34, 1
      %s36 = scalar_select %p33, %s34, %s35
      %p39 = pneg %p33
      %p40 = scmp.eq.s32.totalorder %s12, 3
      %p41 = por %p39, %p40
      %p42 = scmp.ne.s32.totalorder %s34, %s37
      %p43 = scmp.eq.s32.totalorder %s12, 0
      %p44 = por %p42, %p43
      %p45 = scmp.ne.s32.totalorder %s34, %s37
      %p46 = scmp.eq.s32.totalorder %s17, 3
      %p47 = por %p45, %p46
      %p48 = scmp.ne.s32.totalorder %s37, %s38
      %p49 = scmp.eq.s32.totalorder %s17, 0
      %p50 = por %p48, %p49
      %p51 = scmp.ne.s32.totalorder %s37, %s38
      %p52 = scmp.eq.s32.totalorder %s18, 3
      %p53 = por %p51, %p52
      %p55 = scmp.ne.s32.totalorder %s38, %s54
      %p56 = scmp.eq.s32.totalorder %s18, 0
      %p57 = por %p55, %p56
      %s58 = ssub.s32 %s20, %s27
      %p59 = scmp.eq.s32.totalorder %s58, 0
      %s61 = sadd.s32 %s60, 1
      %s62 = scalar_select %p59, %s60, %s61
      %p65 = pneg %p59
      %p66 = scmp.eq.s32.totalorder %s12, 3
      %p67 = por %p65, %p66
      %p68 = scmp.ne.s32.totalorder %s60, %s63
      %p69 = scmp.eq.s32.totalorder %s12, 0
      %p70 = por %p68, %p69
      %p71 = scmp.ne.s32.totalorder %s60, %s63
      %p72 = scmp.eq.s32.totalorder %s17, 3
      %p73 = por %p71, %p72
      %p74 = scmp.ne.s32.totalorder %s63, %s64
      %p75 = scmp.eq.s32.totalorder %s17, 0
      %p76 = por %p74, %p75
      %p77 = scmp.ne.s32.totalorder %s63, %s64
      %p78 = scmp.eq.s32.totalorder %s18, 3
      %p79 = por %p77, %p78
      %p81 = scmp.ne.s32.totalorder %s64, %s80
      %p82 = scmp.eq.s32.totalorder %s18, 0
      %p83 = por %p81, %p82
      %s84 = ssub.s32 %s20, %s27
      %p85 = scmp.eq.s32.totalorder %s84, 0
      %s87 = sadd.s32 %s86, 1
      %s88 = scalar_select %p85, %s86, %s87
      %p91 = pneg %p85
      %p92 = scmp.eq.s32.totalorder %s12, 3
      %p93 = por %p91, %p92
      %p94 = scmp.ne.s32.totalorder %s86, %s89
      %p95 = scmp.eq.s32.totalorder %s12, 0
      %p96 = por %p94, %p95
      %p97 = scmp.ne.s32.totalorder %s86, %s89
      %p98 = scmp.eq.s32.totalorder %s17, 3
      %p99 = por %p97, %p98
      %p100 = scmp.ne.s32.totalorder %s89, %s90
      %p101 = scmp.eq.s32.totalorder %s17, 0
      %p102 = por %p100, %p101
      %p103 = scmp.ne.s32.totalorder %s89, %s90
      %p104 = scmp.eq.s32.totalorder %s18, 3
      %p105 = por %p103, %p104
      %p107 = scmp.ne.s32.totalorder %s90, %s106
      %p108 = scmp.eq.s32.totalorder %s18, 0
      %p109 = por %p107, %p108
      %s110 = ssub.s32 %s19, %s31
      %s111 = ssub.s32 %s20, %s27
      %s112 = sor.u32 %s110, %s111
      %p113 = scmp.eq.s32.totalorder %s112, 0
      %s115 = sadd.s32 %s114, 1
      %s116 = scalar_select %p113, %s114, %s115
      %p119 = pneg %p113
      %p120 = scmp.eq.s32.totalorder %s12, 3
      %p121 = por %p119, %p120
      %p122 = scmp.ne.s32.totalorder %s114, %s117
      %p123 = scmp.eq.s32.totalorder %s12, 0
      %p124 = por %p122, %p123
      %p125 = scmp.ne.s32.totalorder %s114, %s117
      %p126 = scmp.eq.s32.totalorder %s17, 3
      %p127 = por %p125, %p126
      %p128 = scmp.ne.s32.totalorder %s117, %s118
      %p129 = scmp.eq.s32.totalorder %s17, 0
      %p130 = por %p128, %p129
      %p131 = scmp.ne.s32.totalorder %s117, %s118
      %p132 = scmp.eq.s32.totalorder %s18, 3
      %p133 = por %p131, %p132
      %p135 = scmp.ne.s32.totalorder %s118, %s134
      %p136 = scmp.eq.s32.totalorder %s18, 0
      %p137 = por %p135, %p136
      %p138 = scmp.le.s32.totalorder 1, %s12
      %p139 = scmp.lt.s32.totalorder %s12, 5
      %p140 = pnand %p138, %p139
      %p141 = pneg %p140
      // Predicated region
      $region9: #{stem_forward.1} parent=5 // pred_check
        _
      $region10: #{stem_forward.1} parent=5 // pred_check_branch
        %143 = sbr.rel (%p140) target = $region12
      $region11: #{stem_forward.1} parent=5 // pred_region
        %s144 = ssub.s32 %s12, 1
        // Predicated region
        $region13: #{stem_forward.1} parent=11 // pred_check
          %p145 = pneg %p76
        $region14: #{stem_forward.1} parent=11 // pred_check_branch
          %147 = sbr.rel (%p145) target = $region16
        $region15: #{stem_forward.1} parent=11 // pred_region
          %p148 = scmp.lt.s32.totalorder %s22, 0
          %s149 = scalar_select %p148, %s22, 0
          %s150 = smul.addr %s149, 4
          %s151 = scalar_lea.vmem %s1, %s150
        $region16: #{stem_forward.1} parent=11 // pred_fallthru
          _
        // Predicated region
        $region17: #{stem_forward.1} parent=11 // pred_check
          %p152 = pneg %p102
        $region18: #{stem_forward.1} parent=11 // pred_check_branch
          %154 = sbr.rel (%p152) target = $region20
        $region19: #{stem_forward.1} parent=11 // pred_region
          %p155 = scmp.lt.s32.totalorder %s22, 0
          %s156 = scalar_select %p155, %s22, 0
          %s157 = scalar_lea.vmem %s2, %s156
        $region20: #{stem_forward.1} parent=11 // pred_fallthru
          _
      $region12: #{stem_forward.1} parent=5 // pred_fallthru
        _
      %p158 = scmp.lt.s32.totalorder %s12, 4
      // Predicated region
      $region21: #{stem_forward.1} parent=5 // pred_check
        %p159 = pneg %p158
      $region22: #{stem_forward.1} parent=5 // pred_check_branch
        %161 = sbr.rel (%p159) target = $region24
      $region23: #{stem_forward.1} parent=5 // pred_region
        // Predicated region
        $region25: #{stem_forward.1} parent=23 // pred_check
          %p162 = pneg %p44
        $region26: #{stem_forward.1} parent=23 // pred_check_branch
          %164 = sbr.rel (%p162) target = $region28
        $region27: #{stem_forward.1} parent=23 // pred_region
          %s165 = smul.u32 64, %s19
          %p166 = scmp.lt.s32.totalorder %s165, 255
          %s167 = scalar_select %p166, %s165, 255
          %s168 = smul.addr %s167, 4
          %s169 = scalar_lea.vmem %s0, %s168
          %s170 = smul.u32 64, %s19
        $region28: #{stem_forward.1} parent=23 // pred_fallthru
          _
      $region24: #{stem_forward.1} parent=5 // pred_fallthru
        _
      %p171 = scmp.le.s32.totalorder 1, %s12
      %p172 = scmp.lt.s32.totalorder %s12, 5
      %p173 = pnand %p171, %p172
      %p174 = pneg %p173
      // Predicated region
      $region29: #{stem_forward.1} parent=5 // pred_check
        _
      $region30: #{stem_forward.1} parent=5 // pred_check_branch
        %176 = sbr.rel (%p173) target = $region32
      $region31: #{stem_forward.1} parent=5 // pred_region
        %s177 = ssub.s32 %s12, 1
        %s178 = smul.u32 64, %s21
        %p179 = scmp.lt.s32.totalorder %s178, 255
        %s180 = scalar_select %p179, %s178, 255
        %s181 = smul.addr %s180, 4
        %s182 = scalar_lea.vmem %s0, %s181
        %p183 = pneg %p50
        %p184 = pneg %p47
        %p185 = scmp.lt.s32.totalorder %s22, 0
        %s186 = scalar_select %p185, %s22, 0
        %s187 = smul.addr %s186, 4
        %s188 = scalar_lea.vmem %s1, %s187
        %p189 = pneg %p76
        %p190 = pneg %p73
        %p191 = scmp.lt.s32.totalorder %s22, 0
        %s192 = scalar_select %p191, %s22, 0
        %s193 = scalar_lea.vmem %s2, %s192
        %p194 = pneg %p102
        %p195 = pneg %p99
        %p196 = pneg %p130
        %p197 = pneg %p127
        %s198 = sand.u32 %s117, 1
        %s199 = scalar_lea.sflag [#allocation3], %s198
        %s200 = sand.u32 %s117, 1
        %s201 = smul.addr %s200, 256
        %s202 = scalar_lea.vmem [#allocation2], %s201
        %s203 = smul.u32 64, %s21
        %p204 = scmp.lt.s32.totalorder %s203, 255
        %s205 = scalar_select %p204, %s203, 255
        %s206 = smul.addr %s205, 4
        %s207 = scalar_lea.vmem %s0, %s206
        %s208 = smul.u32 64, %s21
        %p209 = scmp.lt.s32.totalorder %s22, 0
        %s210 = scalar_select %p209, %s22, 0
        %s211 = smul.addr %s210, 4
        %s212 = scalar_lea.vmem %s1, %s211
        %p213 = scmp.lt.s32.totalorder %s22, 0
        %s214 = scalar_select %p213, %s22, 0
        %s215 = scalar_lea.vmem %s2, %s214
        %s216 = smul.u32 64, %s21
        %v218 = vld [vmem:[%s207] sm:$0xf]
        %v219 = vld [vmem:[%s207 + $0x4] sm:$0xf]
        %v220 = vld [vmem:[%s207 + $0x8] sm:$0xf]
        %v221 = vld [vmem:[%s207 + $0xc] sm:$0xf]
        %v222 = vld [vmem:[%s207 + $0x10] sm:$0xf]
        %v223 = vld [vmem:[%s207 + $0x14] sm:$0xf]
        %v224 = vld [vmem:[%s207 + $0x18] sm:$0xf]
        %v225 = vld [vmem:[%s207 + $0x1c] sm:$0xf]
        %v226 = vld [vmem:[%s207 + $0x20] sm:$0xf]
        %v227 = vld [vmem:[%s207 + $0x24] sm:$0xf]
        %v228 = vld [vmem:[%s207 + $0x28] sm:$0xf]
        %v229 = vld [vmem:[%s207 + $0x2c] sm:$0xf]
        %v230 = vld [vmem:[%s207 + $0x30] sm:$0xf]
        %v231 = vld [vmem:[%s207 + $0x34] sm:$0xf]
        %v232 = vld [vmem:[%s207 + $0x38] sm:$0xf]
        %v233 = vld [vmem:[%s207 + $0x3c] sm:$0xf]
        %v234 = vld [vmem:[%s207 + $0x40] sm:$0xf]
        %v235 = vld [vmem:[%s207 + $0x44] sm:$0xf]
        %v236 = vld [vmem:[%s207 + $0x48] sm:$0xf]
        %v237 = vld [vmem:[%s207 + $0x4c] sm:$0xf]
        %v238 = vld [vmem:[%s207 + $0x50] sm:$0xf]
        %v239 = vld [vmem:[%s207 + $0x54] sm:$0xf]
        %v240 = vld [vmem:[%s207 + $0x58] sm:$0xf]
        %v241 = vld [vmem:[%s207 + $0x5c] sm:$0xf]
        %v242 = vld [vmem:[%s207 + $0x60] sm:$0xf]
        %v243 = vld [vmem:[%s207 + $0x64] sm:$0xf]
        %v244 = vld [vmem:[%s207 + $0x68] sm:$0xf]
        %v245 = vld [vmem:[%s207 + $0x6c] sm:$0xf]
        %v246 = vld [vmem:[%s207 + $0x70] sm:$0xf]
        %v247 = vld [vmem:[%s207 + $0x74] sm:$0xf]
        %v248 = vld [vmem:[%s207 + $0x78] sm:$0xf]
        %v249 = vld [vmem:[%s207 + $0x7c] sm:$0xf]
        %v250 = vld [vmem:[%s207 + $0x80] sm:$0xf]
        %v251 = vld [vmem:[%s207 + $0x84] sm:$0xf]
        %v252 = vld [vmem:[%s207 + $0x88] sm:$0xf]
        %v253 = vld [vmem:[%s207 + $0x8c] sm:$0xf]
        %v254 = vld [vmem:[%s207 + $0x90] sm:$0xf]
        %v255 = vld [vmem:[%s207 + $0x94] sm:$0xf]
        %v256 = vld [vmem:[%s207 + $0x98] sm:$0xf]
        %v257 = vld [vmem:[%s207 + $0x9c] sm:$0xf]
        %v258 = vld [vmem:[%s207 + $0xa0] sm:$0xf]
        %v259 = vld [vmem:[%s207 + $0xa4] sm:$0xf]
        %v260 = vld [vmem:[%s207 + $0xa8] sm:$0xf]
        %v261 = vld [vmem:[%s207 + $0xac] sm:$0xf]
        %v262 = vld [vmem:[%s207 + $0xb0] sm:$0xf]
        %v263 = vld [vmem:[%s207 + $0xb4] sm:$0xf]
        %v264 = vld [vmem:[%s207 + $0xb8] sm:$0xf]
        %v265 = vld [vmem:[%s207 + $0xbc] sm:$0xf]
        %v266 = vld [vmem:[%s207 + $0xc0] sm:$0xf]
        %v267 = vld [vmem:[%s207 + $0xc4] sm:$0xf]
        %v268 = vld [vmem:[%s207 + $0xc8] sm:$0xf]
        %v269 = vld [vmem:[%s207 + $0xcc] sm:$0xf]
        %v270 = vld [vmem:[%s207 + $0xd0] sm:$0xf]
        %v271 = vld [vmem:[%s207 + $0xd4] sm:$0xf]
        %v272 = vld [vmem:[%s207 + $0xd8] sm:$0xf]
        %v273 = vld [vmem:[%s207 + $0xdc] sm:$0xf]
        %v274 = vld [vmem:[%s207 + $0xe0] sm:$0xf]
        %v275 = vld [vmem:[%s207 + $0xe4] sm:$0xf]
        %v276 = vld [vmem:[%s207 + $0xe8] sm:$0xf]
        %v277 = vld [vmem:[%s207 + $0xec] sm:$0xf]
        %v278 = vld [vmem:[%s207 + $0xf0] sm:$0xf]
        %v279 = vld [vmem:[%s207 + $0xf4] sm:$0xf]
        %v280 = vld [vmem:[%s207 + $0xf8] sm:$0xf]
        %v281 = vld [vmem:[%s207 + $0xfc] sm:$0xf]
        %v282 = vld [vmem:[%s212] sm:$0xf]
        %v283 = vld [vmem:[%s212 + $0x4] sm:$0x1]
        %v284 = vld [vmem:[%s215] sm:$0x1]
        %v286 = vlaneseq
        %v287 = vshrl.u32 %v286, 7
        %v288 = vsub.s32 0, %v287
        %v289 = vrot.slane %v284, %v288
        %v355 = vunpack.c.l.b16 %v218
        %v356 = vunpack.c.l.b16 %v219
        %v357 = vunpack.c.l.b16 %v220
        %v358 = vunpack.c.l.b16 %v221
        %v359 = vunpack.c.l.b16 %v222
        %v360 = vunpack.c.l.b16 %v223
        %v361 = vunpack.c.l.b16 %v224
        %v362 = vunpack.c.l.b16 %v225
        %v363 = vunpack.c.l.b16 %v226
        %v364 = vunpack.c.l.b16 %v227
        %v365 = vunpack.c.l.b16 %v228
        %v366 = vunpack.c.l.b16 %v229
        %v367 = vunpack.c.l.b16 %v230
        %v368 = vunpack.c.l.b16 %v231
        %v369 = vunpack.c.l.b16 %v232
        %v370 = vunpack.c.l.b16 %v233
        %v371 = vunpack.c.l.b16 %v234
        %v372 = vunpack.c.l.b16 %v235
        %v373 = vunpack.c.l.b16 %v236
        %v374 = vunpack.c.l.b16 %v237
        %v375 = vunpack.c.l.b16 %v238
        %v376 = vunpack.c.l.b16 %v239
        %v377 = vunpack.c.l.b16 %v240
        %v378 = vunpack.c.l.b16 %v241
        %v379 = vunpack.c.l.b16 %v242
        %v380 = vunpack.c.l.b16 %v243
        %v381 = vunpack.c.l.b16 %v244
        %v382 = vunpack.c.l.b16 %v245
        %v383 = vunpack.c.l.b16 %v246
        %v384 = vunpack.c.l.b16 %v247
        %v385 = vunpack.c.l.b16 %v248
        %v386 = vunpack.c.l.b16 %v249
        %v387 = vunpack.c.l.b16 %v250
        %v388 = vunpack.c.l.b16 %v251
        %v389 = vunpack.c.l.b16 %v252
        %v390 = vunpack.c.l.b16 %v253
        %v391 = vunpack.c.l.b16 %v254
        %v392 = vunpack.c.l.b16 %v255
        %v393 = vunpack.c.l.b16 %v256
        %v394 = vunpack.c.l.b16 %v257
        %v395 = vunpack.c.l.b16 %v258
        %v396 = vunpack.c.l.b16 %v259
        %v397 = vunpack.c.l.b16 %v260
        %v398 = vunpack.c.l.b16 %v261
        %v399 = vunpack.c.l.b16 %v262
        %v400 = vunpack.c.l.b16 %v263
        %v401 = vunpack.c.l.b16 %v264
        %v402 = vunpack.c.l.b16 %v265
        %v403 = vunpack.c.l.b16 %v266
        %v404 = vunpack.c.l.b16 %v267
        %v405 = vunpack.c.l.b16 %v268
        %v406 = vunpack.c.l.b16 %v269
        %v407 = vunpack.c.l.b16 %v270
        %v408 = vunpack.c.l.b16 %v271
        %v409 = vunpack.c.l.b16 %v272
        %v410 = vunpack.c.l.b16 %v273
        %v411 = vunpack.c.l.b16 %v274
        %v412 = vunpack.c.l.b16 %v275
        %v413 = vunpack.c.l.b16 %v276
        %v414 = vunpack.c.l.b16 %v277
        %v415 = vunpack.c.l.b16 %v278
        %v416 = vunpack.c.l.b16 %v279
        %v417 = vunpack.c.l.b16 %v280
        %v418 = vunpack.c.l.b16 %v281
        %v419 = vpack.c.b16 %v356, %v355
        %v420 = vpack.c.b16 %v358, %v357
        %v421 = vpack.c.b16 %v360, %v359
        %v422 = vpack.c.b16 %v362, %v361
        %v423 = vpack.c.b16 %v364, %v363
        %v424 = vpack.c.b16 %v366, %v365
        %v425 = vpack.c.b16 %v368, %v367
        %v426 = vpack.c.b16 %v370, %v369
        %v427 = vpack.c.b16 %v372, %v371
        %v428 = vpack.c.b16 %v374, %v373
        %v429 = vpack.c.b16 %v376, %v375
        %v430 = vpack.c.b16 %v378, %v377
        %v431 = vpack.c.b16 %v380, %v379
        %v432 = vpack.c.b16 %v382, %v381
        %v433 = vpack.c.b16 %v384, %v383
        %v434 = vpack.c.b16 %v386, %v385
        %v435 = vpack.c.b16 %v388, %v387
        %v436 = vpack.c.b16 %v390, %v389
        %v437 = vpack.c.b16 %v392, %v391
        %v438 = vpack.c.b16 %v394, %v393
        %v439 = vpack.c.b16 %v396, %v395
        %v440 = vpack.c.b16 %v398, %v397
        %v441 = vpack.c.b16 %v400, %v399
        %v442 = vpack.c.b16 %v402, %v401
        %v443 = vpack.c.b16 %v404, %v403
        %v444 = vpack.c.b16 %v406, %v405
        %v445 = vpack.c.b16 %v408, %v407
        %v446 = vpack.c.b16 %v410, %v409
        %v447 = vpack.c.b16 %v412, %v411
        %v448 = vpack.c.b16 %v414, %v413
        %v449 = vpack.c.b16 %v416, %v415
        %v450 = vpack.c.b16 %v418, %v417
        %v453 = vunpack.c.l.b16 %v282
        %v454 = vunpack.c.l.b16 %v283
        %v455 = vpack.c.b16 %v454, %v453
        %vm456 = vcmask 72704
        %v458 = vsel %vm456, %v419, 0
        %v461 = vsel %vm456, %v420, 0
        %v464 = vsel %vm456, %v421, 0
        %v467 = vsel %vm456, %v422, 0
        %v470 = vsel %vm456, %v423, 0
        %v473 = vsel %vm456, %v424, 0
        %v476 = vsel %vm456, %v425, 0
        %v479 = vsel %vm456, %v426, 0
        %v482 = vsel %vm456, %v427, 0
        %v485 = vsel %vm456, %v428, 0
        %v488 = vsel %vm456, %v429, 0
        %v491 = vsel %vm456, %v430, 0
        %v494 = vsel %vm456, %v431, 0
        %v497 = vsel %vm456, %v432, 0
        %v500 = vsel %vm456, %v433, 0
        %v503 = vsel %vm456, %v434, 0
        %v506 = vsel %vm456, %v435, 0
        %v509 = vsel %vm456, %v436, 0
        %v512 = vsel %vm456, %v437, 0
        %v515 = vsel %vm456, %v438, 0
        %v518 = vsel %vm456, %v439, 0
        %v521 = vsel %vm456, %v440, 0
        %v524 = vsel %vm456, %v441, 0
        %v527 = vsel %vm456, %v442, 0
        %v530 = vsel %vm456, %v443, 0
        %v533 = vsel %vm456, %v444, 0
        %v536 = vsel %vm456, %v445, 0
        %v539 = vsel %vm456, %v446, 0
        %v542 = vsel %vm456, %v447, 0
        %v545 = vsel %vm456, %v448, 0
        %v548 = vsel %vm456, %v449, 0
        %v551 = vsel %vm456, %v450, 0
        %vm553 = vcmask 1043456
        %vm554 = vcmask 1044480
        %v555 = vsel %vm553, 4294967295, 65535
        %v556 = vsel %vm554, %v555, 0
        %v558 = vand.u32 %v455, %v556
        %560 = vmatprep.subr.bf16.mxu0 0
        %561 = vmatpush1.bf16.msra.mxu0 %v558
        %562 = vmatprep.subr.bf16.mxu0 0
        %563 = vmatpush1.bf16.msra.mxu0 0
        %564 = vmatprep.subr.bf16.mxu0 0
        %565 = vmatpush1.bf16.msra.mxu0 0
        %566 = vmatprep.subr.bf16.mxu0 0
        %567 = vmatpush1.bf16.msra.mxu0 0
        %568 = vmatprep.subr.bf16.mxu0 0
        %569 = vmatpush1.bf16.msra.mxu0 0
        %570 = vmatprep.subr.bf16.mxu0 0
        %571 = vmatpush1.bf16.msra.mxu0 0
        %572 = vmatprep.subr.bf16.mxu0 0
        %573 = vmatpush1.bf16.msra.mxu0 0
        %574 = vmatprep.subr.bf16.mxu0 0
        %575 = vmatpush1.bf16.msra.mxu0 0
        %576 = vmatprep.subr.bf16.mxu0 0
        %577 = vmatpush1.bf16.msra.mxu0 0
        %578 = vmatprep.subr.bf16.mxu0 0
        %579 = vmatpush1.bf16.msra.mxu0 0
        %580 = vmatprep.subr.bf16.mxu0 0
        %581 = vmatpush1.bf16.msra.mxu0 0
        %582 = vmatprep.subr.bf16.mxu0 0
        %583 = vmatpush1.bf16.msra.mxu0 0
        %584 = vmatprep.subr.bf16.mxu0 0
        %585 = vmatpush1.bf16.msra.mxu0 0
        %586 = vmatprep.subr.bf16.mxu0 0
        %587 = vmatpush1.bf16.msra.mxu0 0
        %588 = vmatprep.subr.bf16.mxu0 0
        %589 = vmatpush1.bf16.msra.mxu0 0
        %590 = vmatprep.subr.bf16.mxu0 0
        %591 = vmatpush1.bf16.msra.mxu0 0
        %592 = vmatprep.mubr.bf16.mxu0 0
        %593 = vmatmul.mubr.bf16.gmra.mrb[0].mxu0 %v458
        %v594 = vpop.f32.mrb[0].mxu0
        %v595 = vadd.f32 %v289, %v594
        %v596 = vpop.f32.mrb[0].mxu0
        %v597 = vpop.f32.mrb[0].mxu0
        %v598 = vadd.f32 %v289, %v597
        %v599 = vpop.f32.mrb[0].mxu0
        %600 = vmatprep.mubr.bf16.mxu0 0
        %601 = vmatmul.mubr.bf16.gmra.mrb[0].mxu0 %v461
        %v602 = vpop.f32.mrb[0].mxu0
        %v603 = vadd.f32 %v289, %v602
        %v604 = vpop.f32.mrb[0].mxu0
        %v605 = vpop.f32.mrb[0].mxu0
        %v606 = vadd.f32 %v289, %v605
        %v607 = vpop.f32.mrb[0].mxu0
        %608 = vmatprep.mubr.bf16.mxu0 0
        %609 = vmatmul.mubr.bf16.gmra.mrb[0].mxu0 %v464
        %v610 = vpop.f32.mrb[0].mxu0
        %v611 = vadd.f32 %v289, %v610
        %v612 = vpop.f32.mrb[0].mxu0
        %v613 = vpop.f32.mrb[0].mxu0
        %v614 = vadd.f32 %v289, %v613
        %v615 = vpop.f32.mrb[0].mxu0
        %616 = vmatprep.mubr.bf16.mxu0 0
        %617 = vmatmul.mubr.bf16.gmra.mrb[0].mxu0 %v467
        %v618 = vpop.f32.mrb[0].mxu0
        %v619 = vadd.f32 %v289, %v618
        %v620 = vpop.f32.mrb[0].mxu0
        %v621 = vpop.f32.mrb[0].mxu0
        %v622 = vadd.f32 %v289, %v621
        %v623 = vpop.f32.mrb[0].mxu0
        %624 = vmatprep.mubr.bf16.mxu0 0
        %625 = vmatmul.mubr.bf16.gmra.mrb[0].mxu0 %v470
        %v626 = vpop.f32.mrb[0].mxu0
        %v627 = vadd.f32 %v289, %v626
        %v628 = vpop.f32.mrb[0].mxu0
        %v629 = vpop.f32.mrb[0].mxu0
        %v630 = vadd.f32 %v289, %v629
        %v631 = vpop.f32.mrb[0].mxu0
        %632 = vmatprep.mubr.bf16.mxu0 0
        %633 = vmatmul.mubr.bf16.gmra.mrb[0].mxu0 %v473
        %v634 = vpop.f32.mrb[0].mxu0
        %v635 = vadd.f32 %v289, %v634
        %v636 = vpop.f32.mrb[0].mxu0
        %v637 = vpop.f32.mrb[0].mxu0
        %v638 = vadd.f32 %v289, %v637
        %v639 = vpop.f32.mrb[0].mxu0
        %640 = vmatprep.mubr.bf16.mxu0 0
        %641 = vmatmul.mubr.bf16.gmra.mrb[0].mxu0 %v476
        %v642 = vpop.f32.mrb[0].mxu0
        %v643 = vadd.f32 %v289, %v642
        %v644 = vpop.f32.mrb[0].mxu0
        %v645 = vpop.f32.mrb[0].mxu0
        %v646 = vadd.f32 %v289, %v645
        %v647 = vpop.f32.mrb[0].mxu0
        %648 = vmatprep.mubr.bf16.mxu0 0
        %649 = vmatmul.mubr.bf16.gmra.mrb[0].mxu0 %v479
        %v650 = vpop.f32.mrb[0].mxu0
        %v651 = vadd.f32 %v289, %v650
        %v652 = vpop.f32.mrb[0].mxu0
        %v653 = vpop.f32.mrb[0].mxu0
        %v654 = vadd.f32 %v289, %v653
        %v655 = vpop.f32.mrb[0].mxu0
        %656 = vmatprep.mubr.bf16.mxu0 0
        %657 = vmatmul.mubr.bf16.gmra.mrb[0].mxu0 %v482
        %v658 = vpop.f32.mrb[0].mxu0
        %v659 = vadd.f32 %v289, %v658
        %v660 = vpop.f32.mrb[0].mxu0
        %v661 = vpop.f32.mrb[0].mxu0
        %v662 = vadd.f32 %v289, %v661
        %v663 = vpop.f32.mrb[0].mxu0
        %664 = vmatprep.mubr.bf16.mxu0 0
        %665 = vmatmul.mubr.bf16.gmra.mrb[0].mxu0 %v485
        %v666 = vpop.f32.mrb[0].mxu0
        %v667 = vadd.f32 %v289, %v666
        %v668 = vpop.f32.mrb[0].mxu0
        %v669 = vpop.f32.mrb[0].mxu0
        %v670 = vadd.f32 %v289, %v669
        %v671 = vpop.f32.mrb[0].mxu0
        %672 = vmatprep.mubr.bf16.mxu0 0
        %673 = vmatmul.mubr.bf16.gmra.mrb[0].mxu0 %v488
        %v674 = vpop.f32.mrb[0].mxu0
        %v675 = vadd.f32 %v289, %v674
        %v676 = vpop.f32.mrb[0].mxu0
        %v677 = vpop.f32.mrb[0].mxu0
        %v678 = vadd.f32 %v289, %v677
        %v679 = vpop.f32.mrb[0].mxu0
        %680 = vmatprep.mubr.bf16.mxu0 0
        %681 = vmatmul.mubr.bf16.gmra.mrb[0].mxu0 %v491
        %v682 = vpop.f32.mrb[0].mxu0
        %v683 = vadd.f32 %v289, %v682
        %v684 = vpop.f32.mrb[0].mxu0
        %v685 = vpop.f32.mrb[0].mxu0
        %v686 = vadd.f32 %v289, %v685
        %v687 = vpop.f32.mrb[0].mxu0
        %688 = vmatprep.mubr.bf16.mxu0 0
        %689 = vmatmul.mubr.bf16.gmra.mrb[0].mxu0 %v494
        %v690 = vpop.f32.mrb[0].mxu0
        %v691 = vadd.f32 %v289, %v690
        %v692 = vpop.f32.mrb[0].mxu0
        %v693 = vpop.f32.mrb[0].mxu0
        %v694 = vadd.f32 %v289, %v693
        %v695 = vpop.f32.mrb[0].mxu0
        %696 = vmatprep.mubr.bf16.mxu0 0
        %697 = vmatmul.mubr.bf16.gmra.mrb[0].mxu0 %v497
        %v698 = vpop.f32.mrb[0].mxu0
        %v699 = vadd.f32 %v289, %v698
        %v700 = vpop.f32.mrb[0].mxu0
        %v701 = vpop.f32.mrb[0].mxu0
        %v702 = vadd.f32 %v289, %v701
        %v703 = vpop.f32.mrb[0].mxu0
        %704 = vmatprep.mubr.bf16.mxu0 0
        %705 = vmatmul.mubr.bf16.gmra.mrb[0].mxu0 %v500
        %v706 = vpop.f32.mrb[0].mxu0
        %v707 = vadd.f32 %v289, %v706
        %v708 = vpop.f32.mrb[0].mxu0
        %v709 = vpop.f32.mrb[0].mxu0
        %v710 = vadd.f32 %v289, %v709
        %v711 = vpop.f32.mrb[0].mxu0
        %712 = vmatprep.mubr.bf16.mxu0 0
        %713 = vmatmul.mubr.bf16.gmra.mrb[0].mxu0 %v503
        %v714 = vpop.f32.mrb[0].mxu0
        %v715 = vadd.f32 %v289, %v714
        %v716 = vpop.f32.mrb[0].mxu0
        %v717 = vpop.f32.mrb[0].mxu0
        %v718 = vadd.f32 %v289, %v717
        %v719 = vpop.f32.mrb[0].mxu0
        %720 = vmatprep.mubr.bf16.mxu0 0
        %721 = vmatmul.mubr.bf16.gmra.mrb[0].mxu0 %v506
        %v722 = vpop.f32.mrb[0].mxu0
        %v723 = vadd.f32 %v289, %v722
        %v724 = vpop.f32.mrb[0].mxu0
        %v725 = vpop.f32.mrb[0].mxu0
        %v726 = vadd.f32 %v289, %v725
        %v727 = vpop.f32.mrb[0].mxu0
        %728 = vmatprep.mubr.bf16.mxu0 0
        %729 = vmatmul.mubr.bf16.gmra.mrb[0].mxu0 %v509
        %v730 = vpop.f32.mrb[0].mxu0
        %v731 = vadd.f32 %v289, %v730
        %v732 = vpop.f32.mrb[0].mxu0
        %v733 = vpop.f32.mrb[0].mxu0
        %v734 = vadd.f32 %v289, %v733
        %v735 = vpop.f32.mrb[0].mxu0
        %736 = vmatprep.mubr.bf16.mxu0 0
        %737 = vmatmul.mubr.bf16.gmra.mrb[0].mxu0 %v512
        %v738 = vpop.f32.mrb[0].mxu0
        %v739 = vadd.f32 %v289, %v738
        %v740 = vpop.f32.mrb[0].mxu0
        %v741 = vpop.f32.mrb[0].mxu0
        %v742 = vadd.f32 %v289, %v741
        %v743 = vpop.f32.mrb[0].mxu0
        %744 = vmatprep.mubr.bf16.mxu0 0
        %745 = vmatmul.mubr.bf16.gmra.mrb[0].mxu0 %v515
        %v746 = vpop.f32.mrb[0].mxu0
        %v747 = vadd.f32 %v289, %v746
        %v748 = vpop.f32.mrb[0].mxu0
        %v749 = vpop.f32.mrb[0].mxu0
        %v750 = vadd.f32 %v289, %v749
        %v751 = vpop.f32.mrb[0].mxu0
        %752 = vmatprep.mubr.bf16.mxu0 0
        %753 = vmatmul.mubr.bf16.gmra.mrb[0].mxu0 %v518
        %v754 = vpop.f32.mrb[0].mxu0
        %v755 = vadd.f32 %v289, %v754
        %v756 = vpop.f32.mrb[0].mxu0
        %v757 = vpop.f32.mrb[0].mxu0
        %v758 = vadd.f32 %v289, %v757
        %v759 = vpop.f32.mrb[0].mxu0
        %760 = vmatprep.mubr.bf16.mxu0 0
        %761 = vmatmul.mubr.bf16.gmra.mrb[0].mxu0 %v521
        %v762 = vpop.f32.mrb[0].mxu0
        %v763 = vadd.f32 %v289, %v762
        %v764 = vpop.f32.mrb[0].mxu0
        %v765 = vpop.f32.mrb[0].mxu0
        %v766 = vadd.f32 %v289, %v765
        %v767 = vpop.f32.mrb[0].mxu0
        %768 = vmatprep.mubr.bf16.mxu0 0
        %769 = vmatmul.mubr.bf16.gmra.mrb[0].mxu0 %v524
        %v770 = vpop.f32.mrb[0].mxu0
        %v771 = vadd.f32 %v289, %v770
        %v772 = vpop.f32.mrb[0].mxu0
        %v773 = vpop.f32.mrb[0].mxu0
        %v774 = vadd.f32 %v289, %v773
        %v775 = vpop.f32.mrb[0].mxu0
        %776 = vmatprep.mubr.bf16.mxu0 0
        %777 = vmatmul.mubr.bf16.gmra.mrb[0].mxu0 %v527
        %v778 = vpop.f32.mrb[0].mxu0
        %v779 = vadd.f32 %v289, %v778
        %v780 = vpop.f32.mrb[0].mxu0
        %v781 = vpop.f32.mrb[0].mxu0
        %v782 = vadd.f32 %v289, %v781
        %v783 = vpop.f32.mrb[0].mxu0
        %784 = vmatprep.mubr.bf16.mxu0 0
        %785 = vmatmul.mubr.bf16.gmra.mrb[0].mxu0 %v530
        %v786 = vpop.f32.mrb[0].mxu0
        %v787 = vadd.f32 %v289, %v786
        %v788 = vpop.f32.mrb[0].mxu0
        %v789 = vpop.f32.mrb[0].mxu0
        %v790 = vadd.f32 %v289, %v789
        %v791 = vpop.f32.mrb[0].mxu0
        %792 = vmatprep.mubr.bf16.mxu0 0
        %793 = vmatmul.mubr.bf16.gmra.mrb[0].mxu0 %v533
        %v794 = vpop.f32.mrb[0].mxu0
        %v795 = vadd.f32 %v289, %v794
        %v796 = vpop.f32.mrb[0].mxu0
        %v797 = vpop.f32.mrb[0].mxu0
        %v798 = vadd.f32 %v289, %v797
        %v799 = vpop.f32.mrb[0].mxu0
        %800 = vmatprep.mubr.bf16.mxu0 0
        %801 = vmatmul.mubr.bf16.gmra.mrb[0].mxu0 %v536
        %v802 = vpop.f32.mrb[0].mxu0
        %v803 = vadd.f32 %v289, %v802
        %v804 = vpop.f32.mrb[0].mxu0
        %v805 = vpop.f32.mrb[0].mxu0
        %v806 = vadd.f32 %v289, %v805
        %v807 = vpop.f32.mrb[0].mxu0
        %808 = vmatprep.mubr.bf16.mxu0 0
        %809 = vmatmul.mubr.bf16.gmra.mrb[0].mxu0 %v539
        %v810 = vpop.f32.mrb[0].mxu0
        %v811 = vadd.f32 %v289, %v810
        %v812 = vpop.f32.mrb[0].mxu0
        %v813 = vpop.f32.mrb[0].mxu0
        %v814 = vadd.f32 %v289, %v813
        %v815 = vpop.f32.mrb[0].mxu0
        %816 = vmatprep.mubr.bf16.mxu0 0
        %817 = vmatmul.mubr.bf16.gmra.mrb[0].mxu0 %v542
        %v818 = vpop.f32.mrb[0].mxu0
        %v819 = vadd.f32 %v289, %v818
        %v820 = vpop.f32.mrb[0].mxu0
        %v821 = vpop.f32.mrb[0].mxu0
        %v822 = vadd.f32 %v289, %v821
        %v823 = vpop.f32.mrb[0].mxu0
        %824 = vmatprep.mubr.bf16.mxu0 0
        %825 = vmatmul.mubr.bf16.gmra.mrb[0].mxu0 %v545
        %v826 = vpop.f32.mrb[0].mxu0
        %v827 = vadd.f32 %v289, %v826
        %v828 = vpop.f32.mrb[0].mxu0
        %v829 = vpop.f32.mrb[0].mxu0
        %v830 = vadd.f32 %v289, %v829
        %v831 = vpop.f32.mrb[0].mxu0
        %832 = vmatprep.mubr.bf16.mxu0 0
        %833 = vmatmul.mubr.bf16.gmra.mrb[0].mxu0 %v548
        %v834 = vpop.f32.mrb[0].mxu0
        %v835 = vadd.f32 %v289, %v834
        %v836 = vpop.f32.mrb[0].mxu0
        %v837 = vpop.f32.mrb[0].mxu0
        %v838 = vadd.f32 %v289, %v837
        %v839 = vpop.f32.mrb[0].mxu0
        %840 = vmatprep.mubr.bf16.mxu0 0
        %841 = vmatmul.mubr.bf16.gmra.mrb[0].mxu0 %v551
        %v842 = vpop.f32.mrb[0].mxu0
        %v843 = vadd.f32 %v289, %v842
        %v844 = vpop.f32.mrb[0].mxu0
        %v845 = vpop.f32.mrb[0].mxu0
        %v846 = vadd.f32 %v289, %v845
        %v847 = vpop.f32.mrb[0].mxu0
        %848 = vdwg.mxu0
        %v849 = vxor.u32 %v595, 2147483648
        %v850 = vxor.u32 %v598, 2147483648
        %v851 = vxor.u32 %v603, 2147483648
        %v852 = vxor.u32 %v606, 2147483648
        %v853 = vxor.u32 %v611, 2147483648
        %v854 = vxor.u32 %v614, 2147483648
        %v855 = vxor.u32 %v619, 2147483648
        %v856 = vxor.u32 %v622, 2147483648
        %v857 = vxor.u32 %v627, 2147483648
        %v858 = vxor.u32 %v630, 2147483648
        %v859 = vxor.u32 %v635, 2147483648
        %v860 = vxor.u32 %v638, 2147483648
        %v861 = vxor.u32 %v643, 2147483648
        %v862 = vxor.u32 %v646, 2147483648
        %v863 = vxor.u32 %v651, 2147483648
        %v864 = vxor.u32 %v654, 2147483648
        %v865 = vxor.u32 %v659, 2147483648
        %v866 = vxor.u32 %v662, 2147483648
        %v867 = vxor.u32 %v667, 2147483648
        %v868 = vxor.u32 %v670, 2147483648
        %v869 = vxor.u32 %v675, 2147483648
        %v870 = vxor.u32 %v678, 2147483648
        %v871 = vxor.u32 %v683, 2147483648
        %v872 = vxor.u32 %v686, 2147483648
        %v873 = vxor.u32 %v691, 2147483648
        %v874 = vxor.u32 %v694, 2147483648
        %v875 = vxor.u32 %v699, 2147483648
        %v876 = vxor.u32 %v702, 2147483648
        %v877 = vxor.u32 %v707, 2147483648
        %v878 = vxor.u32 %v710, 2147483648
        %v879 = vxor.u32 %v715, 2147483648
        %v880 = vxor.u32 %v718, 2147483648
        %v881 = vxor.u32 %v723, 2147483648
        %v882 = vxor.u32 %v726, 2147483648
        %v883 = vxor.u32 %v731, 2147483648
        %v884 = vxor.u32 %v734, 2147483648
        %v885 = vxor.u32 %v739, 2147483648
        %v886 = vxor.u32 %v742, 2147483648
        %v887 = vxor.u32 %v747, 2147483648
        %v888 = vxor.u32 %v750, 2147483648
        %v889 = vxor.u32 %v755, 2147483648
        %v890 = vxor.u32 %v758, 2147483648
        %v891 = vxor.u32 %v763, 2147483648
        %v892 = vxor.u32 %v766, 2147483648
        %v893 = vxor.u32 %v771, 2147483648
        %v894 = vxor.u32 %v774, 2147483648
        %v895 = vxor.u32 %v779, 2147483648
        %v896 = vxor.u32 %v782, 2147483648
        %v897 = vxor.u32 %v787, 2147483648
        %v898 = vxor.u32 %v790, 2147483648
        %v899 = vxor.u32 %v795, 2147483648
        %v900 = vxor.u32 %v798, 2147483648
        %v901 = vxor.u32 %v803, 2147483648
        %v902 = vxor.u32 %v806, 2147483648
        %v903 = vxor.u32 %v811, 2147483648
        %v904 = vxor.u32 %v814, 2147483648
        %v905 = vxor.u32 %v819, 2147483648
        %v906 = vxor.u32 %v822, 2147483648
        %v907 = vxor.u32 %v827, 2147483648
        %v908 = vxor.u32 %v830, 2147483648
        %v909 = vxor.u32 %v835, 2147483648
        %v910 = vxor.u32 %v838, 2147483648
        %v911 = vxor.u32 %v843, 2147483648
        %v912 = vxor.u32 %v846, 2147483648
        %v913 = vmul.f32 %v849, 1.442695
        %v914 = vpow.pop %v913
        %v915 = vmul.f32 %v850, 1.442695
        %v916 = vpow.pop %v915
        %v917 = vmul.f32 %v851, 1.442695
        %v918 = vpow.pop %v917
        %v919 = vmul.f32 %v852, 1.442695
        %v920 = vpow.pop %v919
        %v921 = vmul.f32 %v853, 1.442695
        %v922 = vpow.pop %v921
        %v923 = vmul.f32 %v854, 1.442695
        %v924 = vpow.pop %v923
        %v925 = vmul.f32 %v855, 1.442695
        %v926 = vpow.pop %v925
        %v927 = vmul.f32 %v856, 1.442695
        %v928 = vpow.pop %v927
        %v929 = vmul.f32 %v857, 1.442695
        %v930 = vpow.pop %v929
        %v931 = vmul.f32 %v858, 1.442695
        %v932 = vpow.pop %v931
        %v933 = vmul.f32 %v859, 1.442695
        %v934 = vpow.pop %v933
        %v935 = vmul.f32 %v860, 1.442695
        %v936 = vpow.pop %v935
        %v937 = vmul.f32 %v861, 1.442695
        %v938 = vpow.pop %v937
        %v939 = vmul.f32 %v862, 1.442695
        %v940 = vpow.pop %v939
        %v941 = vmul.f32 %v863, 1.442695
        %v942 = vpow.pop %v941
        %v943 = vmul.f32 %v864, 1.442695
        %v944 = vpow.pop %v943
        %v945 = vmul.f32 %v865, 1.442695
        %v946 = vpow.pop %v945
        %v947 = vmul.f32 %v866, 1.442695
        %v948 = vpow.pop %v947
        %v949 = vmul.f32 %v867, 1.442695
        %v950 = vpow.pop %v949
        %v951 = vmul.f32 %v868, 1.442695
        %v952 = vpow.pop %v951
        %v953 = vmul.f32 %v869, 1.442695
        %v954 = vpow.pop %v953
        %v955 = vmul.f32 %v870, 1.442695
        %v956 = vpow.pop %v955
        %v957 = vmul.f32 %v871, 1.442695
        %v958 = vpow.pop %v957
        %v959 = vmul.f32 %v872, 1.442695
        %v960 = vpow.pop %v959
        %v961 = vmul.f32 %v873, 1.442695
        %v962 = vpow.pop %v961
        %v963 = vmul.f32 %v874, 1.442695
        %v964 = vpow.pop %v963
        %v965 = vmul.f32 %v875, 1.442695
        %v966 = vpow.pop %v965
        %v967 = vmul.f32 %v876, 1.442695
        %v968 = vpow.pop %v967
        %v969 = vmul.f32 %v877, 1.442695
        %v970 = vpow.pop %v969
        %v971 = vmul.f32 %v878, 1.442695
        %v972 = vpow.pop %v971
        %v973 = vmul.f32 %v879, 1.442695
        %v974 = vpow.pop %v973
        %v975 = vmul.f32 %v880, 1.442695
        %v976 = vpow.pop %v975
        %v977 = vmul.f32 %v881, 1.442695
        %v978 = vpow.pop %v977
        %v979 = vmul.f32 %v882, 1.442695
        %v980 = vpow.pop %v979
        %v981 = vmul.f32 %v883, 1.442695
        %v982 = vpow.pop %v981
        %v983 = vmul.f32 %v884, 1.442695
        %v984 = vpow.pop %v983
        %v985 = vmul.f32 %v885, 1.442695
        %v986 = vpow.pop %v985
        %v987 = vmul.f32 %v886, 1.442695
        %v988 = vpow.pop %v987
        %v989 = vmul.f32 %v887, 1.442695
        %v990 = vpow.pop %v989
        %v991 = vmul.f32 %v888, 1.442695
        %v992 = vpow.pop %v991
        %v993 = vmul.f32 %v889, 1.442695
        %v994 = vpow.pop %v993
        %v995 = vmul.f32 %v890, 1.442695
        %v996 = vpow.pop %v995
        %v997 = vmul.f32 %v891, 1.442695
        %v998 = vpow.pop %v997
        %v999 = vmul.f32 %v892, 1.442695
        %v1000 = vpow.pop %v999
        %v1001 = vmul.f32 %v893, 1.442695
        %v1002 = vpow.pop %v1001
        %v1003 = vmul.f32 %v894, 1.442695
        %v1004 = vpow.pop %v1003
        %v1005 = vmul.f32 %v895, 1.442695
        %v1006 = vpow.pop %v1005
        %v1007 = vmul.f32 %v896, 1.442695
        %v1008 = vpow.pop %v1007
        %v1009 = vmul.f32 %v897, 1.442695
        %v1010 = vpow.pop %v1009
        %v1011 = vmul.f32 %v898, 1.442695
        %v1012 = vpow.pop %v1011
        %v1013 = vmul.f32 %v899, 1.442695
        %v1014 = vpow.pop %v1013
        %v1015 = vmul.f32 %v900, 1.442695
        %v1016 = vpow.pop %v1015
        %v1017 = vmul.f32 %v901, 1.442695
        %v1018 = vpow.pop %v1017
        %v1019 = vmul.f32 %v902, 1.442695
        %v1020 = vpow.pop %v1019
        %v1021 = vmul.f32 %v903, 1.442695
        %v1022 = vpow.pop %v1021
        %v1023 = vmul.f32 %v904, 1.442695
        %v1024 = vpow.pop %v1023
        %v1025 = vmul.f32 %v905, 1.442695
        %v1026 = vpow.pop %v1025
        %v1027 = vmul.f32 %v906, 1.442695
        %v1028 = vpow.pop %v1027
        %v1029 = vmul.f32 %v907, 1.442695
        %v1030 = vpow.pop %v1029
        %v1031 = vmul.f32 %v908, 1.442695
        %v1032 = vpow.pop %v1031
        %v1033 = vmul.f32 %v909, 1.442695
        %v1034 = vpow.pop %v1033
        %v1035 = vmul.f32 %v910, 1.442695
        %v1036 = vpow.pop %v1035
        %v1037 = vmul.f32 %v911, 1.442695
        %v1038 = vpow.pop %v1037
        %v1039 = vmul.f32 %v912, 1.442695
        %v1040 = vpow.pop %v1039
        %v1041 = vadd.f32 %v914, 1.0
        %v1042 = vadd.f32 %v916, 1.0
        %v1043 = vadd.f32 %v918, 1.0
        %v1044 = vadd.f32 %v920, 1.0
        %v1045 = vadd.f32 %v922, 1.0
        %v1046 = vadd.f32 %v924, 1.0
        %v1047 = vadd.f32 %v926, 1.0
        %v1048 = vadd.f32 %v928, 1.0
        %v1049 = vadd.f32 %v930, 1.0
        %v1050 = vadd.f32 %v932, 1.0
        %v1051 = vadd.f32 %v934, 1.0
        %v1052 = vadd.f32 %v936, 1.0
        %v1053 = vadd.f32 %v938, 1.0
        %v1054 = vadd.f32 %v940, 1.0
        %v1055 = vadd.f32 %v942, 1.0
        %v1056 = vadd.f32 %v944, 1.0
        %v1057 = vadd.f32 %v946, 1.0
        %v1058 = vadd.f32 %v948, 1.0
        %v1059 = vadd.f32 %v950, 1.0
        %v1060 = vadd.f32 %v952, 1.0
        %v1061 = vadd.f32 %v954, 1.0
        %v1062 = vadd.f32 %v956, 1.0
        %v1063 = vadd.f32 %v958, 1.0
        %v1064 = vadd.f32 %v960, 1.0
        %v1065 = vadd.f32 %v962, 1.0
        %v1066 = vadd.f32 %v964, 1.0
        %v1067 = vadd.f32 %v966, 1.0
        %v1068 = vadd.f32 %v968, 1.0
        %v1069 = vadd.f32 %v970, 1.0
        %v1070 = vadd.f32 %v972, 1.0
        %v1071 = vadd.f32 %v974, 1.0
        %v1072 = vadd.f32 %v976, 1.0
        %v1073 = vadd.f32 %v978, 1.0
        %v1074 = vadd.f32 %v980, 1.0
        %v1075 = vadd.f32 %v982, 1.0
        %v1076 = vadd.f32 %v984, 1.0
        %v1077 = vadd.f32 %v986, 1.0
        %v1078 = vadd.f32 %v988, 1.0
        %v1079 = vadd.f32 %v990, 1.0
        %v1080 = vadd.f32 %v992, 1.0
        %v1081 = vadd.f32 %v994, 1.0
        %v1082 = vadd.f32 %v996, 1.0
        %v1083 = vadd.f32 %v998, 1.0
        %v1084 = vadd.f32 %v1000, 1.0
        %v1085 = vadd.f32 %v1002, 1.0
        %v1086 = vadd.f32 %v1004, 1.0
        %v1087 = vadd.f32 %v1006, 1.0
        %v1088 = vadd.f32 %v1008, 1.0
        %v1089 = vadd.f32 %v1010, 1.0
        %v1090 = vadd.f32 %v1012, 1.0
        %v1091 = vadd.f32 %v1014, 1.0
        %v1092 = vadd.f32 %v1016, 1.0
        %v1093 = vadd.f32 %v1018, 1.0
        %v1094 = vadd.f32 %v1020, 1.0
        %v1095 = vadd.f32 %v1022, 1.0
        %v1096 = vadd.f32 %v1024, 1.0
        %v1097 = vadd.f32 %v1026, 1.0
        %v1098 = vadd.f32 %v1028, 1.0
        %v1099 = vadd.f32 %v1030, 1.0
        %v1100 = vadd.f32 %v1032, 1.0
        %v1101 = vadd.f32 %v1034, 1.0
        %v1102 = vadd.f32 %v1036, 1.0
        %v1103 = vadd.f32 %v1038, 1.0
        %v1104 = vadd.f32 %v1040, 1.0
        %v1105 = vrcp.pop %v1041
        %v1106 = vmul.f32 1.0, %v1105
        %v1107 = vrcp.pop %v1042
        %v1108 = vmul.f32 1.0, %v1107
        %v1109 = vrcp.pop %v1043
        %v1110 = vmul.f32 1.0, %v1109
        %v1111 = vrcp.pop %v1044
        %v1112 = vmul.f32 1.0, %v1111
        %v1113 = vrcp.pop %v1045
        %v1114 = vmul.f32 1.0, %v1113
        %v1115 = vrcp.pop %v1046
        %v1116 = vmul.f32 1.0, %v1115
        %v1117 = vrcp.pop %v1047
        %v1118 = vmul.f32 1.0, %v1117
        %v1119 = vrcp.pop %v1048
        %v1120 = vmul.f32 1.0, %v1119
        %v1121 = vrcp.pop %v1049
        %v1122 = vmul.f32 1.0, %v1121
        %v1123 = vrcp.pop %v1050
        %v1124 = vmul.f32 1.0, %v1123
        %v1125 = vrcp.pop %v1051
        %v1126 = vmul.f32 1.0, %v1125
        %v1127 = vrcp.pop %v1052
        %v1128 = vmul.f32 1.0, %v1127
        %v1129 = vrcp.pop %v1053
        %v1130 = vmul.f32 1.0, %v1129
        %v1131 = vrcp.pop %v1054
        %v1132 = vmul.f32 1.0, %v1131
        %v1133 = vrcp.pop %v1055
        %v1134 = vmul.f32 1.0, %v1133
        %v1135 = vrcp.pop %v1056
        %v1136 = vmul.f32 1.0, %v1135
        %v1137 = vrcp.pop %v1057
        %v1138 = vmul.f32 1.0, %v1137
        %v1139 = vrcp.pop %v1058
        %v1140 = vmul.f32 1.0, %v1139
        %v1141 = vrcp.pop %v1059
        %v1142 = vmul.f32 1.0, %v1141
        %v1143 = vrcp.pop %v1060
        %v1144 = vmul.f32 1.0, %v1143
        %v1145 = vrcp.pop %v1061
        %v1146 = vmul.f32 1.0, %v1145
        %v1147 = vrcp.pop %v1062
        %v1148 = vmul.f32 1.0, %v1147
        %v1149 = vrcp.pop %v1063
        %v1150 = vmul.f32 1.0, %v1149
        %v1151 = vrcp.pop %v1064
        %v1152 = vmul.f32 1.0, %v1151
        %v1153 = vrcp.pop %v1065
        %v1154 = vmul.f32 1.0, %v1153
        %v1155 = vrcp.pop %v1066
        %v1156 = vmul.f32 1.0, %v1155
        %v1157 = vrcp.pop %v1067
        %v1158 = vmul.f32 1.0, %v1157
        %v1159 = vrcp.pop %v1068
        %v1160 = vmul.f32 1.0, %v1159
        %v1161 = vrcp.pop %v1069
        %v1162 = vmul.f32 1.0, %v1161
        %v1163 = vrcp.pop %v1070
        %v1164 = vmul.f32 1.0, %v1163
        %v1165 = vrcp.pop %v1071
        %v1166 = vmul.f32 1.0, %v1165
        %v1167 = vrcp.pop %v1072
        %v1168 = vmul.f32 1.0, %v1167
        %v1169 = vrcp.pop %v1073
        %v1170 = vmul.f32 1.0, %v1169
        %v1171 = vrcp.pop %v1074
        %v1172 = vmul.f32 1.0, %v1171
        %v1173 = vrcp.pop %v1075
        %v1174 = vmul.f32 1.0, %v1173
        %v1175 = vrcp.pop %v1076
        %v1176 = vmul.f32 1.0, %v1175
        %v1177 = vrcp.pop %v1077
        %v1178 = vmul.f32 1.0, %v1177
        %v1179 = vrcp.pop %v1078
        %v1180 = vmul.f32 1.0, %v1179
        %v1181 = vrcp.pop %v1079
        %v1182 = vmul.f32 1.0, %v1181
        %v1183 = vrcp.pop %v1080
        %v1184 = vmul.f32 1.0, %v1183
        %v1185 = vrcp.pop %v1081
        %v1186 = vmul.f32 1.0, %v1185
        %v1187 = vrcp.pop %v1082
        %v1188 = vmul.f32 1.0, %v1187
        %v1189 = vrcp.pop %v1083
        %v1190 = vmul.f32 1.0, %v1189
        %v1191 = vrcp.pop %v1084
        %v1192 = vmul.f32 1.0, %v1191
        %v1193 = vrcp.pop %v1085
        %v1194 = vmul.f32 1.0, %v1193
        %v1195 = vrcp.pop %v1086
        %v1196 = vmul.f32 1.0, %v1195
        %v1197 = vrcp.pop %v1087
        %v1198 = vmul.f32 1.0, %v1197
        %v1199 = vrcp.pop %v1088
        %v1200 = vmul.f32 1.0, %v1199
        %v1201 = vrcp.pop %v1089
        %v1202 = vmul.f32 1.0, %v1201
        %v1203 = vrcp.pop %v1090
        %v1204 = vmul.f32 1.0, %v1203
        %v1205 = vrcp.pop %v1091
        %v1206 = vmul.f32 1.0, %v1205
        %v1207 = vrcp.pop %v1092
        %v1208 = vmul.f32 1.0, %v1207
        %v1209 = vrcp.pop %v1093
        %v1210 = vmul.f32 1.0, %v1209
        %v1211 = vrcp.pop %v1094
        %v1212 = vmul.f32 1.0, %v1211
        %v1213 = vrcp.pop %v1095
        %v1214 = vmul.f32 1.0, %v1213
        %v1215 = vrcp.pop %v1096
        %v1216 = vmul.f32 1.0, %v1215
        %v1217 = vrcp.pop %v1097
        %v1218 = vmul.f32 1.0, %v1217
        %v1219 = vrcp.pop %v1098
        %v1220 = vmul.f32 1.0, %v1219
        %v1221 = vrcp.pop %v1099
        %v1222 = vmul.f32 1.0, %v1221
        %v1223 = vrcp.pop %v1100
        %v1224 = vmul.f32 1.0, %v1223
        %v1225 = vrcp.pop %v1101
        %v1226 = vmul.f32 1.0, %v1225
        %v1227 = vrcp.pop %v1102
        %v1228 = vmul.f32 1.0, %v1227
        %v1229 = vrcp.pop %v1103
        %v1230 = vmul.f32 1.0, %v1229
        %v1231 = vrcp.pop %v1104
        %v1232 = vmul.f32 1.0, %v1231
        %v1233 = vmul.f32 %v595, %v1106
        %v1234 = vmul.f32 %v598, %v1108
        %v1235 = vmul.f32 %v603, %v1110
        %v1236 = vmul.f32 %v606, %v1112
        %v1237 = vmul.f32 %v611, %v1114
        %v1238 = vmul.f32 %v614, %v1116
        %v1239 = vmul.f32 %v619, %v1118
        %v1240 = vmul.f32 %v622, %v1120
        %v1241 = vmul.f32 %v627, %v1122
        %v1242 = vmul.f32 %v630, %v1124
        %v1243 = vmul.f32 %v635, %v1126
        %v1244 = vmul.f32 %v638, %v1128
        %v1245 = vmul.f32 %v643, %v1130
        %v1246 = vmul.f32 %v646, %v1132
        %v1247 = vmul.f32 %v651, %v1134
        %v1248 = vmul.f32 %v654, %v1136
        %v1249 = vmul.f32 %v659, %v1138
        %v1250 = vmul.f32 %v662, %v1140
        %v1251 = vmul.f32 %v667, %v1142
        %v1252 = vmul.f32 %v670, %v1144
        %v1253 = vmul.f32 %v675, %v1146
        %v1254 = vmul.f32 %v678, %v1148
        %v1255 = vmul.f32 %v683, %v1150
        %v1256 = vmul.f32 %v686, %v1152
        %v1257 = vmul.f32 %v691, %v1154
        %v1258 = vmul.f32 %v694, %v1156
        %v1259 = vmul.f32 %v699, %v1158
        %v1260 = vmul.f32 %v702, %v1160
        %v1261 = vmul.f32 %v707, %v1162
        %v1262 = vmul.f32 %v710, %v1164
        %v1263 = vmul.f32 %v715, %v1166
        %v1264 = vmul.f32 %v718, %v1168
        %v1265 = vmul.f32 %v723, %v1170
        %v1266 = vmul.f32 %v726, %v1172
        %v1267 = vmul.f32 %v731, %v1174
        %v1268 = vmul.f32 %v734, %v1176
        %v1269 = vmul.f32 %v739, %v1178
        %v1270 = vmul.f32 %v742, %v1180
        %v1271 = vmul.f32 %v747, %v1182
        %v1272 = vmul.f32 %v750, %v1184
        %v1273 = vmul.f32 %v755, %v1186
        %v1274 = vmul.f32 %v758, %v1188
        %v1275 = vmul.f32 %v763, %v1190
        %v1276 = vmul.f32 %v766, %v1192
        %v1277 = vmul.f32 %v771, %v1194
        %v1278 = vmul.f32 %v774, %v1196
        %v1279 = vmul.f32 %v779, %v1198
        %v1280 = vmul.f32 %v782, %v1200
        %v1281 = vmul.f32 %v787, %v1202
        %v1282 = vmul.f32 %v790, %v1204
        %v1283 = vmul.f32 %v795, %v1206
        %v1284 = vmul.f32 %v798, %v1208
        %v1285 = vmul.f32 %v803, %v1210
        %v1286 = vmul.f32 %v806, %v1212
        %v1287 = vmul.f32 %v811, %v1214
        %v1288 = vmul.f32 %v814, %v1216
        %v1289 = vmul.f32 %v819, %v1218
        %v1290 = vmul.f32 %v822, %v1220
        %v1291 = vmul.f32 %v827, %v1222
        %v1292 = vmul.f32 %v830, %v1224
        %v1293 = vmul.f32 %v835, %v1226
        %v1294 = vmul.f32 %v838, %v1228
        %v1295 = vmul.f32 %v843, %v1230
        %v1296 = vmul.f32 %v846, %v1232
        %v1297 = vpack.c.bf16 %v1234, %v1233
        %v1298 = vpack.c.bf16 %v1236, %v1235
        %v1299 = vpack.c.bf16 %v1238, %v1237
        %v1300 = vpack.c.bf16 %v1240, %v1239
        %v1301 = vpack.c.bf16 %v1242, %v1241
        %v1302 = vpack.c.bf16 %v1244, %v1243
        %v1303 = vpack.c.bf16 %v1246, %v1245
        %v1304 = vpack.c.bf16 %v1248, %v1247
        %v1305 = vpack.c.bf16 %v1250, %v1249
        %v1306 = vpack.c.bf16 %v1252, %v1251
        %v1307 = vpack.c.bf16 %v1254, %v1253
        %v1308 = vpack.c.bf16 %v1256, %v1255
        %v1309 = vpack.c.bf16 %v1258, %v1257
        %v1310 = vpack.c.bf16 %v1260, %v1259
        %v1311 = vpack.c.bf16 %v1262, %v1261
        %v1312 = vpack.c.bf16 %v1264, %v1263
        %v1313 = vpack.c.bf16 %v1266, %v1265
        %v1314 = vpack.c.bf16 %v1268, %v1267
        %v1315 = vpack.c.bf16 %v1270, %v1269
        %v1316 = vpack.c.bf16 %v1272, %v1271
        %v1317 = vpack.c.bf16 %v1274, %v1273
        %v1318 = vpack.c.bf16 %v1276, %v1275
        %v1319 = vpack.c.bf16 %v1278, %v1277
        %v1320 = vpack.c.bf16 %v1280, %v1279
        %v1321 = vpack.c.bf16 %v1282, %v1281
        %v1322 = vpack.c.bf16 %v1284, %v1283
        %v1323 = vpack.c.bf16 %v1286, %v1285
        %v1324 = vpack.c.bf16 %v1288, %v1287
        %v1325 = vpack.c.bf16 %v1290, %v1289
        %v1326 = vpack.c.bf16 %v1292, %v1291
        %v1327 = vpack.c.bf16 %v1294, %v1293
        %v1328 = vpack.c.bf16 %v1296, %v1295
        %v1361 = vunpack.c.l.b16 %v1297
        %v1362 = vunpack.c.h.b16 %v1297
        %v1363 = vunpack.c.l.b16 %v1298
        %v1364 = vunpack.c.h.b16 %v1298
        %v1365 = vunpack.c.l.b16 %v1299
        %v1366 = vunpack.c.h.b16 %v1299
        %v1367 = vunpack.c.l.b16 %v1300
        %v1368 = vunpack.c.h.b16 %v1300
        %v1369 = vunpack.c.l.b16 %v1301
        %v1370 = vunpack.c.h.b16 %v1301
        %v1371 = vunpack.c.l.b16 %v1302
        %v1372 = vunpack.c.h.b16 %v1302
        %v1373 = vunpack.c.l.b16 %v1303
        %v1374 = vunpack.c.h.b16 %v1303
        %v1375 = vunpack.c.l.b16 %v1304
        %v1376 = vunpack.c.h.b16 %v1304
        %v1377 = vunpack.c.l.b16 %v1305
        %v1378 = vunpack.c.h.b16 %v1305
        %v1379 = vunpack.c.l.b16 %v1306
        %v1380 = vunpack.c.h.b16 %v1306
        %v1381 = vunpack.c.l.b16 %v1307
        %v1382 = vunpack.c.h.b16 %v1307
        %v1383 = vunpack.c.l.b16 %v1308
        %v1384 = vunpack.c.h.b16 %v1308
        %v1385 = vunpack.c.l.b16 %v1309
        %v1386 = vunpack.c.h.b16 %v1309
        %v1387 = vunpack.c.l.b16 %v1310
        %v1388 = vunpack.c.h.b16 %v1310
        %v1389 = vunpack.c.l.b16 %v1311
        %v1390 = vunpack.c.h.b16 %v1311
        %v1391 = vunpack.c.l.b16 %v1312
        %v1392 = vunpack.c.h.b16 %v1312
        %v1393 = vunpack.c.l.b16 %v1313
        %v1394 = vunpack.c.h.b16 %v1313
        %v1395 = vunpack.c.l.b16 %v1314
        %v1396 = vunpack.c.h.b16 %v1314
        %v1397 = vunpack.c.l.b16 %v1315
        %v1398 = vunpack.c.h.b16 %v1315
        %v1399 = vunpack.c.l.b16 %v1316
        %v1400 = vunpack.c.h.b16 %v1316
        %v1401 = vunpack.c.l.b16 %v1317
        %v1402 = vunpack.c.h.b16 %v1317
        %v1403 = vunpack.c.l.b16 %v1318
        %v1404 = vunpack.c.h.b16 %v1318
        %v1405 = vunpack.c.l.b16 %v1319
        %v1406 = vunpack.c.h.b16 %v1319
        %v1407 = vunpack.c.l.b16 %v1320
        %v1408 = vunpack.c.h.b16 %v1320
        %v1409 = vunpack.c.l.b16 %v1321
        %v1410 = vunpack.c.h.b16 %v1321
        %v1411 = vunpack.c.l.b16 %v1322
        %v1412 = vunpack.c.h.b16 %v1322
        %v1413 = vunpack.c.l.b16 %v1323
        %v1414 = vunpack.c.h.b16 %v1323
        %v1415 = vunpack.c.l.b16 %v1324
        %v1416 = vunpack.c.h.b16 %v1324
        %v1417 = vunpack.c.l.b16 %v1325
        %v1418 = vunpack.c.h.b16 %v1325
        %v1419 = vunpack.c.l.b16 %v1326
        %v1420 = vunpack.c.h.b16 %v1326
        %v1421 = vunpack.c.l.b16 %v1327
        %v1422 = vunpack.c.h.b16 %v1327
        %v1423 = vunpack.c.l.b16 %v1328
        %v1424 = vunpack.c.h.b16 %v1328
        %v1425 = vpack.c.b16 %v1361, %v1361
        %v1426 = vpack.c.b16 %v1362, %v1362
        %v1427 = vpack.c.b16 %v1363, %v1363
        %v1428 = vpack.c.b16 %v1364, %v1364
        %v1429 = vpack.c.b16 %v1365, %v1365
        %v1430 = vpack.c.b16 %v1366, %v1366
        %v1431 = vpack.c.b16 %v1367, %v1367
        %v1432 = vpack.c.b16 %v1368, %v1368
        %v1433 = vpack.c.b16 %v1369, %v1369
        %v1434 = vpack.c.b16 %v1370, %v1370
        %v1435 = vpack.c.b16 %v1371, %v1371
        %v1436 = vpack.c.b16 %v1372, %v1372
        %v1437 = vpack.c.b16 %v1373, %v1373
        %v1438 = vpack.c.b16 %v1374, %v1374
        %v1439 = vpack.c.b16 %v1375, %v1375
        %v1440 = vpack.c.b16 %v1376, %v1376
        %v1441 = vpack.c.b16 %v1377, %v1377
        %v1442 = vpack.c.b16 %v1378, %v1378
        %v1443 = vpack.c.b16 %v1379, %v1379
        %v1444 = vpack.c.b16 %v1380, %v1380
        %v1445 = vpack.c.b16 %v1381, %v1381
        %v1446 = vpack.c.b16 %v1382, %v1382
        %v1447 = vpack.c.b16 %v1383, %v1383
        %v1448 = vpack.c.b16 %v1384, %v1384
        %v1449 = vpack.c.b16 %v1385, %v1385
        %v1450 = vpack.c.b16 %v1386, %v1386
        %v1451 = vpack.c.b16 %v1387, %v1387
        %v1452 = vpack.c.b16 %v1388, %v1388
        %v1453 = vpack.c.b16 %v1389, %v1389
        %v1454 = vpack.c.b16 %v1390, %v1390
        %v1455 = vpack.c.b16 %v1391, %v1391
        %v1456 = vpack.c.b16 %v1392, %v1392
        %v1457 = vpack.c.b16 %v1393, %v1393
        %v1458 = vpack.c.b16 %v1394, %v1394
        %v1459 = vpack.c.b16 %v1395, %v1395
        %v1460 = vpack.c.b16 %v1396, %v1396
        %v1461 = vpack.c.b16 %v1397, %v1397
        %v1462 = vpack.c.b16 %v1398, %v1398
        %v1463 = vpack.c.b16 %v1399, %v1399
        %v1464 = vpack.c.b16 %v1400, %v1400
        %v1465 = vpack.c.b16 %v1401, %v1401
        %v1466 = vpack.c.b16 %v1402, %v1402
        %v1467 = vpack.c.b16 %v1403, %v1403
        %v1468 = vpack.c.b16 %v1404, %v1404
        %v1469 = vpack.c.b16 %v1405, %v1405
        %v1470 = vpack.c.b16 %v1406, %v1406
        %v1471 = vpack.c.b16 %v1407, %v1407
        %v1472 = vpack.c.b16 %v1408, %v1408
        %v1473 = vpack.c.b16 %v1409, %v1409
        %v1474 = vpack.c.b16 %v1410, %v1410
        %v1475 = vpack.c.b16 %v1411, %v1411
        %v1476 = vpack.c.b16 %v1412, %v1412
        %v1477 = vpack.c.b16 %v1413, %v1413
        %v1478 = vpack.c.b16 %v1414, %v1414
        %v1479 = vpack.c.b16 %v1415, %v1415
        %v1480 = vpack.c.b16 %v1416, %v1416
        %v1481 = vpack.c.b16 %v1417, %v1417
        %v1482 = vpack.c.b16 %v1418, %v1418
        %v1483 = vpack.c.b16 %v1419, %v1419
        %v1484 = vpack.c.b16 %v1420, %v1420
        %v1485 = vpack.c.b16 %v1421, %v1421
        %v1486 = vpack.c.b16 %v1422, %v1422
        %v1487 = vpack.c.b16 %v1423, %v1423
        %v1488 = vpack.c.b16 %v1424, %v1424
        %1553 = vst [vmem:[%s202] sm:$0xf] %v1425
        %1554 = vst [vmem:[%s202 + $0x4] sm:$0xf] %v1426
        %1555 = vst [vmem:[%s202 + $0x8] sm:$0xf] %v1427
        %1556 = vst [vmem:[%s202 + $0xc] sm:$0xf] %v1428
        %1557 = vst [vmem:[%s202 + $0x10] sm:$0xf] %v1429
        %1558 = vst [vmem:[%s202 + $0x14] sm:$0xf] %v1430
        %1559 = vst [vmem:[%s202 + $0x18] sm:$0xf] %v1431
        %1560 = vst [vmem:[%s202 + $0x1c] sm:$0xf] %v1432
        %1561 = vst [vmem:[%s202 + $0x20] sm:$0xf] %v1433
        %1562 = vst [vmem:[%s202 + $0x24] sm:$0xf] %v1434
        %1563 = vst [vmem:[%s202 + $0x28] sm:$0xf] %v1435
        %1564 = vst [vmem:[%s202 + $0x2c] sm:$0xf] %v1436
        %1565 = vst [vmem:[%s202 + $0x30] sm:$0xf] %v1437
        %1566 = vst [vmem:[%s202 + $0x34] sm:$0xf] %v1438
        %1567 = vst [vmem:[%s202 + $0x38] sm:$0xf] %v1439
        %1568 = vst [vmem:[%s202 + $0x3c] sm:$0xf] %v1440
        %1569 = vst [vmem:[%s202 + $0x40] sm:$0xf] %v1441
        %1570 = vst [vmem:[%s202 + $0x44] sm:$0xf] %v1442
        %1571 = vst [vmem:[%s202 + $0x48] sm:$0xf] %v1443
        %1572 = vst [vmem:[%s202 + $0x4c] sm:$0xf] %v1444
        %1573 = vst [vmem:[%s202 + $0x50] sm:$0xf] %v1445
        %1574 = vst [vmem:[%s202 + $0x54] sm:$0xf] %v1446
        %1575 = vst [vmem:[%s202 + $0x58] sm:$0xf] %v1447
        %1576 = vst [vmem:[%s202 + $0x5c] sm:$0xf] %v1448
        %1577 = vst [vmem:[%s202 + $0x60] sm:$0xf] %v1449
        %1578 = vst [vmem:[%s202 + $0x64] sm:$0xf] %v1450
        %1579 = vst [vmem:[%s202 + $0x68] sm:$0xf] %v1451
        %1580 = vst [vmem:[%s202 + $0x6c] sm:$0xf] %v1452
        %1581 = vst [vmem:[%s202 + $0x70] sm:$0xf] %v1453
        %1582 = vst [vmem:[%s202 + $0x74] sm:$0xf] %v1454
        %1583 = vst [vmem:[%s202 + $0x78] sm:$0xf] %v1455
        %1584 = vst [vmem:[%s202 + $0x7c] sm:$0xf] %v1456
        %1585 = vst [vmem:[%s202 + $0x80] sm:$0xf] %v1457
        %1586 = vst [vmem:[%s202 + $0x84] sm:$0xf] %v1458
        %1587 = vst [vmem:[%s202 + $0x88] sm:$0xf] %v1459
        %1588 = vst [vmem:[%s202 + $0x8c] sm:$0xf] %v1460
        %1589 = vst [vmem:[%s202 + $0x90] sm:$0xf] %v1461
        %1590 = vst [vmem:[%s202 + $0x94] sm:$0xf] %v1462
        %1591 = vst [vmem:[%s202 + $0x98] sm:$0xf] %v1463
        %1592 = vst [vmem:[%s202 + $0x9c] sm:$0xf] %v1464
        %1593 = vst [vmem:[%s202 + $0xa0] sm:$0xf] %v1465
        %1594 = vst [vmem:[%s202 + $0xa4] sm:$0xf] %v1466
        %1595 = vst [vmem:[%s202 + $0xa8] sm:$0xf] %v1467
        %1596 = vst [vmem:[%s202 + $0xac] sm:$0xf] %v1468
        %1597 = vst [vmem:[%s202 + $0xb0] sm:$0xf] %v1469
        %1598 = vst [vmem:[%s202 + $0xb4] sm:$0xf] %v1470
        %1599 = vst [vmem:[%s202 + $0xb8] sm:$0xf] %v1471
        %1600 = vst [vmem:[%s202 + $0xbc] sm:$0xf] %v1472
        %1601 = vst [vmem:[%s202 + $0xc0] sm:$0xf] %v1473
        %1602 = vst [vmem:[%s202 + $0xc4] sm:$0xf] %v1474
        %1603 = vst [vmem:[%s202 + $0xc8] sm:$0xf] %v1475
        %1604 = vst [vmem:[%s202 + $0xcc] sm:$0xf] %v1476
        %1605 = vst [vmem:[%s202 + $0xd0] sm:$0xf] %v1477
        %1606 = vst [vmem:[%s202 + $0xd4] sm:$0xf] %v1478
        %1607 = vst [vmem:[%s202 + $0xd8] sm:$0xf] %v1479
        %1608 = vst [vmem:[%s202 + $0xdc] sm:$0xf] %v1480
        %1609 = vst [vmem:[%s202 + $0xe0] sm:$0xf] %v1481
        %1610 = vst [vmem:[%s202 + $0xe4] sm:$0xf] %v1482
        %1611 = vst [vmem:[%s202 + $0xe8] sm:$0xf] %v1483
        %1612 = vst [vmem:[%s202 + $0xec] sm:$0xf] %v1484
        %1613 = vst [vmem:[%s202 + $0xf0] sm:$0xf] %v1485
        %1614 = vst [vmem:[%s202 + $0xf4] sm:$0xf] %v1486
        %1615 = vst [vmem:[%s202 + $0xf8] sm:$0xf] %v1487
        %1616 = vst [vmem:[%s202 + $0xfc] sm:$0xf] %v1488
        %s1617 = sand.u32 %s117, 1
        %s1618 = scalar_lea.sflag [#allocation3], %s1617
        %s1619 = sand.u32 %s117, 1
        %s1620 = smul.addr %s1619, 256
        %s1621 = scalar_lea.vmem [#allocation2], %s1620
        // Predicated region
        $region33: #{stem_forward.1} parent=31 // pred_check
          %p1622 = pneg %p127
        $region34: #{stem_forward.1} parent=31 // pred_check_branch
          %1624 = sbr.rel (%p1622) target = $region36
        $region35: #{stem_forward.1} parent=31 // pred_region
          %s1625 = smul.u32 64, %s21
          %s1627 = ssub.s32 4096, 4096
          %1628 = vsyncadd %s1618, %s1627
          %s1629 = sadd.s32 %s22, %s1625
          %s1630 = smul.addr %s1629, 64
          %s1631 = scalar_lea.hbm %s3, %s1630
          %s1632 = sshll.u32 %s1621, 4
          %s1633 = int_to_ptr.vmem [resolvable:$true] %s1632
          %1638 = dma.vmem_to_hbm [thread:$0]  %s1633, 4096, %s1631, %s1618, 64, 64, 4
        $region36: #{stem_forward.1} parent=31 // pred_fallthru
          _
      $region32: #{stem_forward.1} parent=5 // pred_fallthru
        _
      %p1639 = scmp.le.s32.totalorder 2, %s12
      // Predicated region
      $region37: #{stem_forward.1} parent=5 // pred_check
        %p1640 = pneg %p1639
      $region38: #{stem_forward.1} parent=5 // pred_check_branch
        %1642 = sbr.rel (%p1640) target = $region40
      $region39: #{stem_forward.1} parent=5 // pred_region
        %s1643 = ssub.s32 %s12, 2
        // Predicated region
        $region41: #{stem_forward.1} parent=39 // pred_check
          %p1644 = pneg %p133
        $region42: #{stem_forward.1} parent=39 // pred_check_branch
          %1646 = sbr.rel (%p1644) target = $region44
        $region43: #{stem_forward.1} parent=39 // pred_region
          %s1647 = sand.u32 %s118, 1
          %s1648 = scalar_lea.sflag [#allocation3], %s1647
          %s1649 = sand.u32 %s118, 1
          %s1650 = smul.addr %s1649, 256
          %s1651 = scalar_lea.vmem [#allocation2], %s1650
          %1652 = dma.done %s1648, 4096
        $region44: #{stem_forward.1} parent=39 // pred_fallthru
          _
      $region40: #{stem_forward.1} parent=5 // pred_fallthru
        _
    $region6: #{stem_forward.1} parent=1 // loop_footer
      %s16 = sadd.s32 1, %s12
    $region7: #{stem_forward.1} parent=1 // loop_footer_branch
      %11 = sbr.rel target = $region3
    $region8: #{stem_forward.1} parent=1 // loop_exit
      _
    %1653 = vsyncpa [#allocation3], 1
    %s1654 = scalar_lea.sflag [#allocation3], 1
    %1655 = vsyncpa %s1654, 1

</llo_original>
